<compile_context>
chip_gen: v7x
topology: tpu7x:2x2x1
jax: 0.10.0
libtpu: 0.0.40
codegen_flags: <defaults>
</compile_context>

<pallas_src>
import functools
import math

import jax
import jax.numpy as jnp
from jax.experimental import pallas as pl
from jax.experimental.pallas import tpu as pltpu

_LN_EPS = 1e-5  # torch nn.LayerNorm default
_MIB = 1024 * 1024


# ----------------------------------------------------------------------------- helpers
def _round_up(a, b):
    return (a + b - 1) // b * b


def _vmem_cap_bytes():
    """Per-chip scoped-VMEM ceiling: physical VMEM minus headroom, capped at 100 MiB."""
    phys = 64 * _MIB  # conservative default (v7x has 64 MiB/TC; v5e/v6e have 128 MiB)
    try:
        phys = int(pltpu.get_tpu_info().vmem_capacity_bytes)
    except Exception:
        pass
    return max(32 * _MIB, min(phys - 12 * _MIB, 100 * _MIB))


def _compiler_params(n_parallel_axes, vmem_bytes_estimate, cap):
    limit = int(min(max(2.5 * vmem_bytes_estimate, 32 * _MIB), cap))
    return pltpu.CompilerParams(
        dimension_semantics=("parallel",) * n_parallel_axes,
        vmem_limit_bytes=limit)


def _token_tile(n_pad, tm):
    """Pick a row-tile that divides n_pad, is a multiple of 8, and (when possible)
    gives >= 2 grid steps so v7x can shard the 'parallel' axis across both TCs."""
    tm_eff = max(8, min(tm, n_pad))
    if n_pad // tm_eff < 2 and n_pad >= 16:
        tm_eff = n_pad // 2
    tm_eff = max(8, tm_eff - tm_eff % 8)
    while n_pad % tm_eff:
        tm_eff -= 8
    return tm_eff


def _heads_per_group(n_heads, head_dim):
    """Group heads so the attention block lane width is a multiple of 128 (or full E)."""
    if (n_heads * head_dim) % 128 != 0:
        return n_heads                      # small E: one group spanning the full E
    for d in range(1, n_heads + 1):
        if n_heads % d == 0 and (d * head_dim) % 128 == 0:
            return d
    return n_heads


def _layernorm_f32(z, gamma, beta, eps):
    mu = jnp.mean(z, axis=-1, keepdims=True)
    var = jnp.mean(jnp.square(z - mu), axis=-1, keepdims=True)
    zhat = (z - mu) * jax.lax.rsqrt(var + eps)
    return zhat * gamma.astype(jnp.float32) + beta.astype(jnp.float32)


# ----------------------------------------------------------------------------- kernels
def qkv_kernel(x_ref, w_ref, b_ref, q_ref, k_ref, v_ref):
    # One wide [tm,E] @ [E,3E] matmul keeps the 256-wide MXU full even for E < 256
    # and cuts weight-push / result-pop overhead 3x vs. three separate projections.
    e = q_ref.shape[-1]
    z = jnp.dot(x_ref[...], w_ref[...], preferred_element_type=jnp.float32)
    z = z + b_ref[...].astype(jnp.float32)
    q_ref[...] = z[:, :e].astype(q_ref.dtype)
    k_ref[...] = z[:, e:2 * e].astype(k_ref.dtype)
    v_ref[...] = z[:, 2 * e:].astype(v_ref.dtype)


def attention_kernel(q_ref, k_ref, v_ref, o_ref, *, head_dim, s_real):
    # refs: (S_pad, heads_per_group * head_dim) for one (batch, head-group).
    # The 1/sqrt(head_dim) scale is folded into Wq/bq at load time.
    q = q_ref[...]
    k = k_ref[...]
    v = v_ref[...]
    s_pad = q.shape[0]
    n_h = q.shape[1] // head_dim
    outs = []
    for h in range(n_h):                    # static loop over heads in the group
        lo, hi = h * head_dim, (h + 1) * head_dim
        qh, kh, vh = q[:, lo:hi], k[:, lo:hi], v[:, lo:hi]
        # QK^T without materializing k.T: contract the last dims directly.
        sc = jax.lax.dot_general(qh, kh, (((1,), (1,)), ((), ())),
                                 preferred_element_type=jnp.float32)
        if s_real != s_pad:                 # mask zero-padded key rows (static branch)
            kidx = jax.lax.broadcasted_iota(jnp.int32, (s_pad, s_pad), 1)
            sc = jnp.where(kidx < s_real, sc, -1e30)
        m = jnp.max(sc, axis=-1, keepdims=True)
        e = jnp.exp(sc - m)
        denom = jnp.sum(e, axis=-1, keepdims=True)
        # dropout(attention) is identity in eval mode.
        # Normalize AFTER the PV matmul: S*Dh multiplies + one EUP reciprocal per row
        # instead of S*S divides on the VPU.
        pv = jnp.dot(e.astype(v.dtype), vh, preferred_element_type=jnp.float32)
        outs.append(pv * pl.reciprocal(denom, approx=True))
    o = outs[0] if n_h == 1 else jnp.concatenate(outs, axis=-1)
    o_ref[...] = o.astype(o_ref.dtype)      # already in (S, H*Dh) merged-head layout


def attn_ln_kernel(ctx_ref, res_ref, wo_ref, bo_ref, g_ref, b_ref, o_ref, *, eps):
    y = jnp.dot(ctx_ref[...], wo_ref[...], preferred_element_type=jnp.float32)
    y = y + bo_ref[...].astype(jnp.float32)
    z = res_ref[...].astype(jnp.float32) + y          # residual (dropout = identity)
    o_ref[...] = _layernorm_f32(z, g_ref[...], b_ref[...], eps).astype(o_ref.dtype)


def ffn_ln_kernel(x_ref, w1_ref, b1_ref, w2_ref, b2_ref, g_ref, b_ref, o_ref, *, eps):
    x = x_ref[...]
    h = jnp.dot(x, w1_ref[...], preferred_element_type=jnp.float32)
    h = jnp.maximum(h + b1_ref[...].astype(jnp.float32), 0.0)   # ReLU (dropout = identity)
    y = jnp.dot(h.astype(w2_ref.dtype), w2_ref[...], preferred_element_type=jnp.float32)
    y = y + b2_ref[...].astype(jnp.float32)
    z = x.astype(jnp.float32) + y
    o_ref[...] = _layernorm_f32(z, g_ref[...], b_ref[...], eps).astype(o_ref.dtype)


def post_attn_fused_kernel(ctx_ref, res_ref, wo_ref, bo_ref, g1_ref, be1_ref,
                           w1_ref, b1_ref, w2_ref, b2_ref, g2_ref, be2_ref,
                           o_ref, *, eps):
    # fc_out + residual + LN1 + FFN + residual + LN2 in one pass over the token tile:
    # removes one full HBM round trip of src1 and one pipeline ramp.
    y = jnp.dot(ctx_ref[...], wo_ref[...], preferred_element_type=jnp.float32)
    y = y + bo_ref[...].astype(jnp.float32)
    src1 = _layernorm_f32(res_ref[...].astype(jnp.float32) + y,
                          g1_ref[...], be1_ref[...], eps)
    h = jnp.dot(src1.astype(w1_ref.dtype), w1_ref[...], preferred_element_type=jnp.float32)
    h = jnp.maximum(h + b1_ref[...].astype(jnp.float32), 0.0)
    y2 = jnp.dot(h.astype(w2_ref.dtype), w2_ref[...], preferred_element_type=jnp.float32)
    y2 = y2 + b2_ref[...].astype(jnp.float32)
    o_ref[...] = _layernorm_f32(src1 + y2, g2_ref[...], be2_ref[...], eps).astype(o_ref.dtype)


# ----------------------------------------------------------------------------- wrappers
def qkv_projection(x2d, p, *, tm_eff, cap):
    n, e = x2d.shape
    it = x2d.dtype.itemsize
    row_spec = pl.BlockSpec((tm_eff, e), lambda i: (i, 0))
    w_spec = pl.BlockSpec((e, 3 * e), lambda i: (0, 0))
    b_spec = pl.BlockSpec((1, 3 * e), lambda i: (0, 0))

    cost = pl.CostEstimate(flops=int(2 * n * e * 3 * e), transcendentals=0,
                           bytes_accessed=int((4 * n * e + 3 * e * e + 3 * e) * it))
    vmem_est = (2 * (3 * e * e + 3 * e) * it + 2 * 4 * tm_eff * e * it
                + 4 * tm_eff * 3 * e)

    return pl.pallas_call(
        qkv_kernel,
        out_shape=tuple(jax.ShapeDtypeStruct((n, e), x2d.dtype) for _ in range(3)),
        grid=(n // tm_eff,),
        in_specs=[row_spec, w_spec, b_spec],
        out_specs=(row_spec, row_spec, row_spec),
        compiler_params=_compiler_params(1, vmem_est, cap),
        cost_estimate=cost,
    )(x2d, p["w_qkv_t"], p["b_qkv"])


def attention(q2d, k2d, v2d, *, b, s_pad, s_real, n_heads, head_dim, cap):
    e = n_heads * head_dim
    # Free reshapes (row-major) -- no transposes, no extra HBM traffic.
    q3 = q2d.reshape(b, s_pad, e)
    k3 = k2d.reshape(b, s_pad, e)
    v3 = v2d.reshape(b, s_pad, e)

    hpg = _heads_per_group(n_heads, head_dim)
    n_groups = n_heads // hpg
    gw = hpg * head_dim
    it = q2d.dtype.itemsize
    spec = pl.BlockSpec((None, s_pad, gw), lambda bi, gi: (bi, 0, gi))

    cost = pl.CostEstimate(flops=int(4 * b * n_heads * s_pad * s_pad * head_dim),
                           transcendentals=int(b * n_heads * s_pad * s_pad),
                           bytes_accessed=int(4 * b * s_pad * e * it))
    vmem_est = 2 * 4 * s_pad * gw * it + 3 * s_pad * s_pad * 4

    ctx = pl.pallas_call(
        functools.partial(attention_kernel, head_dim=head_dim, s_real=s_real),
        out_shape=jax.ShapeDtypeStruct((b, s_pad, e), q2d.dtype),
        grid=(b, n_groups),
        in_specs=[spec, spec, spec],
        out_specs=spec,
        compiler_params=_compiler_params(2, vmem_est, cap),
        cost_estimate=cost,
    )(q3, k3, v3)
    return ctx.reshape(b * s_pad, e)        # free reshape; already merged-head layout


def post_attention(ctx2d, res2d, p, *, tm_eff, cap):
    n, e = ctx2d.shape
    f = p["w1_t"].shape[1]
    it = ctx2d.dtype.itemsize

    row_spec = pl.BlockSpec((tm_eff, e), lambda i: (i, 0))
    wee_spec = pl.BlockSpec((e, e), lambda i: (0, 0))
    w1_spec = pl.BlockSpec((e, f), lambda i: (0, 0))
    w2_spec = pl.BlockSpec((f, e), lambda i: (0, 0))
    bf_spec = pl.BlockSpec((1, f), lambda i: (0, 0))
    be_spec = pl.BlockSpec((1, e), lambda i: (0, 0))

    weight_bytes = (e * e + 2 * e * f) * it
    fuse = 2 * weight_bytes + 4 * tm_eff * (3 * e + f) * 4 < 0.8 * cap

    if fuse:
        cost = pl.CostEstimate(
            flops=int(2 * n * e * e + 4 * n * e * f + 16 * n * e),
            transcendentals=int(2 * n),
            bytes_accessed=int((3 * n * e + e * e + 2 * e * f + 2 * f + 6 * e) * it))
        vmem_est = (2 * weight_bytes + 2 * 3 * tm_eff * e * it
                    + 4 * tm_eff * (2 * e + f))
        return pl.pallas_call(
            functools.partial(post_attn_fused_kernel, eps=_LN_EPS),
            out_shape=jax.ShapeDtypeStruct((n, e), ctx2d.dtype),
            grid=(n // tm_eff,),
            in_specs=[row_spec, row_spec, wee_spec, be_spec, be_spec, be_spec,
                      w1_spec, bf_spec, w2_spec, be_spec, be_spec, be_spec],
            out_specs=row_spec,
            compiler_params=_compiler_params(1, vmem_est, cap),
            cost_estimate=cost,
        )(ctx2d, res2d, p["wo_t"], p["bo"], p["g1"], p["be1"],
          p["w1_t"], p["b1"], p["w2_t"], p["b2"], p["g2"], p["be2"])

    # Split path when the combined weight set would crowd VMEM (e.g. v7x, large E*F).
    # TODO(synk): for 2*E*F weights that alone exceed VMEM, add an F-reduction grid axis
    #             with an f32 accumulator instead of keeping both FFN weights resident.
    cost1 = pl.CostEstimate(flops=int(2 * n * e * e + 8 * n * e), transcendentals=int(n),
                            bytes_accessed=int((3 * n * e + e * e + 3 * e) * it))
    vmem1 = 2 * (e * e + 3 * e) * it + 2 * 3 * tm_eff * e * it + 4 * tm_eff * e
    src1 = pl.pallas_call(
        functools.partial(attn_ln_kernel, eps=_LN_EPS),
        out_shape=jax.ShapeDtypeStruct((n, e), ctx2d.dtype),
        grid=(n // tm_eff,),
        in_specs=[row_spec, row_spec, wee_spec, be_spec, be_spec, be_spec],
        out_specs=row_spec,
        compiler_params=_compiler_params(1, vmem1, cap),
        cost_estimate=cost1,
    )(ctx2d, res2d, p["wo_t"], p["bo"], p["g1"], p["be1"])

    cost2 = pl.CostEstimate(flops=int(4 * n * e * f + 8 * n * e), transcendentals=int(n),
                            bytes_accessed=int((2 * n * e + 2 * e * f + f + 3 * e) * it))
    vmem2 = 2 * (2 * e * f + f + 3 * e) * it + 2 * 2 * tm_eff * e * it + 4 * tm_eff * f
    return pl.pallas_call(
        functools.partial(ffn_ln_kernel, eps=_LN_EPS),
        out_shape=jax.ShapeDtypeStruct((n, e), ctx2d.dtype),
        grid=(n // tm_eff,),
        in_specs=[row_spec, w1_spec, bf_spec, w2_spec, be_spec, be_spec, be_spec],
        out_specs=row_spec,
        compiler_params=_compiler_params(1, vmem2, cap),
        cost_estimate=cost2,
    )(src1, p["w1_t"], p["b1"], p["w2_t"], p["b2"], p["g2"], p["be2"])


def encoder_layer(x, params, *, n_heads, tm=None, src_mask=None):
    """x: [B, S, E]; params from prepare_params(). Eval-mode EncoderLayer forward."""
    if src_mask is not None:
        raise NotImplementedError("src_mask path not implemented")  # TODO(synk)
    b, s, e = x.shape
    dh = e // n_heads
    cap = _vmem_cap_bytes()
    if tm is None:
        # 512-row tiles reach ~85% of HBM roofline on 128 MiB VMEM parts (v5e/v6e);
        # stay at 256 when VMEM is tight (v7x: 64 MiB per TensorCore).
        tm = 512 if cap >= 96 * _MIB else 256

    s_pad = _round_up(s, 8)
    if s_pad != s:
        x = jnp.pad(x, ((0, 0), (0, s_pad - s), (0, 0)))
    n_pad = b * s_pad
    x2d = x.reshape(n_pad, e)               # free reshape
    tm_eff = _token_tile(n_pad, tm)

    q2d, k2d, v2d = qkv_projection(x2d, params, tm_eff=tm_eff, cap=cap)
    ctx2d = attention(q2d, k2d, v2d, b=b, s_pad=s_pad, s_real=s,
                      n_heads=n_heads, head_dim=dh, cap=cap)
    out2d = post_attention(ctx2d, x2d, params, tm_eff=tm_eff, cap=cap)
    out = out2d.reshape(b, s_pad, e)
    return out[:, :s, :] if s_pad != s else out


def prepare_params(tp, n_heads, dtype=None):
    """Convert torch-convention params ((out,in) weights, (out,) vectors) into the
    kernel layout ONCE at load time: transpose weights, concatenate Wq|Wk|Wv into one
    (E,3E) matrix, and fold the 1/sqrt(head_dim) attention scale into Wq/bq — all in
    f32, before any dtype cast."""
    e = tp["wq"].shape[0]
    scale = 1.0 / math.sqrt(e // n_heads)

    def w(name):
        return jnp.asarray(tp[name], jnp.float32).T          # (in, out)

    def v(name):
        return jnp.asarray(tp[name], jnp.float32).reshape(1, -1)

    p = {
        "w_qkv_t": jnp.concatenate([w("wq") * scale, w("wk"), w("wv")], axis=1),
        "b_qkv": jnp.concatenate([v("bq") * scale, v("bk"), v("bv")], axis=1),
        "wo_t": w("wo"), "bo": v("bo"),
        "w1_t": w("w1"), "b1": v("b1"),
        "w2_t": w("w2"), "b2": v("b2"),
        "g1": v("g1"), "be1": v("be1"),
        "g2": v("g2"), "be2": v("be2"),
    }
    if dtype is not None:
        p = jax.tree_util.tree_map(lambda a: a.astype(dtype), p)
    return p


# ----------------------------------------------------------------------------- reference
def reference_encoder_layer(x, tp, *, n_heads, eps=_LN_EPS):
    hi = jax.lax.Precision.HIGHEST

    def lin(t, wmat, bias):
        return jnp.matmul(t, wmat.T, precision=hi) + bias

    b, s, e = x.shape
    dh = e // n_heads
    q = lin(x, tp["wq"], tp["bq"]).reshape(b, s, n_heads, dh).transpose(0, 2, 1, 3)
    k = lin(x, tp["wk"], tp["bk"]).reshape(b, s, n_heads, dh).transpose(0, 2, 1, 3)
    v = lin(x, tp["wv"], tp["bv"]).reshape(b, s, n_heads, dh).transpose(0, 2, 1, 3)
    sc = jnp.einsum("bhqd,bhkd->bhqk", q, k, precision=hi) / math.sqrt(dh)
    p = jax.nn.softmax(sc, axis=-1)
    ctx = jnp.einsum("bhqk,bhkd->bhqd", p, v, precision=hi)
    ctx = ctx.transpose(0, 2, 1, 3).reshape(b, s, e)
    attn_out = lin(ctx, tp["wo"], tp["bo"])

    def ln(z, g, bb):
        mu = z.mean(-1, keepdims=True)
        var = ((z - mu) ** 2).mean(-1, keepdims=True)
        return (z - mu) / jnp.sqrt(var + eps) * g + bb

    src1 = ln(x + attn_out, tp["g1"], tp["be1"])
    h = jnp.maximum(lin(src1, tp["w1"], tp["b1"]), 0.0)
    ff = lin(h, tp["w2"], tp["b2"])
    return ln(src1 + ff, tp["g2"], tp["be2"])


# ----------------------------------------------------------------------------- demo
if __name__ == "__main__":
    batch, seq, emb_dim, n_heads, ff_dim = 2, 8, 32, 4, 64
    key = jax.random.PRNGKey(0)
    ks = jax.random.split(key, 16)

    def init(k, shape, scale=0.1):
        return jax.random.normal(k, shape, dtype=jnp.float32) * scale

    # torch nn.Linear / nn.LayerNorm convention parameters
    tp = {
        "wq": init(ks[0], (emb_dim, emb_dim)), "bq": init(ks[1], (emb_dim,)),
        "wk": init(ks[2], (emb_dim, emb_dim)), "bk": init(ks[3], (emb_dim,)),
        "wv": init(ks[4], (emb_dim, emb_dim)), "bv": init(ks[5], (emb_dim,)),
        "wo": init(ks[6], (emb_dim, emb_dim)), "bo": init(ks[7], (emb_dim,)),
        "w1": init(ks[8], (ff_dim, emb_dim)),  "b1": init(ks[9], (ff_dim,)),
        "w2": init(ks[10], (emb_dim, ff_dim)), "b2": init(ks[11], (emb_dim,)),
        "g1": jnp.ones((emb_dim,), jnp.float32), "be1": jnp.zeros((emb_dim,), jnp.float32),
        "g2": jnp.ones((emb_dim,), jnp.float32), "be2": jnp.zeros((emb_dim,), jnp.float32),
    }
    x = jax.random.normal(ks[12], (batch, seq, emb_dim), dtype=jnp.float32)

    run = jax.jit(functools.partial(encoder_layer, n_heads=n_heads))

    # f32 path + correctness check vs pure-JAX reference (eval-mode semantics).
    params_f32 = prepare_params(tp, n_heads)
    out = run(x, params_f32)
    jax.block_until_ready(out)
    ref = reference_encoder_layer(x, tp, n_heads=n_heads)
    assert out.shape == ref.shape
    assert jnp.allclose(out, ref, atol=2e-2, rtol=2e-2), "f32 mismatch vs reference"

    # bf16 operands with f32 accumulation (MXU-friendly path).
    params_bf16 = prepare_params(tp, n_heads, dtype=jnp.bfloat16)
    out_bf16 = run(x.astype(jnp.bfloat16), params_bf16)
    jax.block_until_ready(out_bf16)
    out_bf16_f32 = out_bf16.astype(jnp.float32)
    assert bool(jnp.all(jnp.isfinite(out_bf16_f32)))
    assert jnp.allclose(out_bf16_f32, ref, atol=0.25, rtol=0.05), "bf16 path diverged"

    print("KERNEL_OK")
</pallas_src>

<mosaic_0001>
module attributes {stable_mosaic.version = 11 : i64} {
  func.func @post_attn_fused_kernel(%arg0: i32, %arg1: memref<8x32xf32, #tpu.memory_space<vmem>>, %arg2: memref<8x32xf32, #tpu.memory_space<vmem>>, %arg3: memref<32x32xf32, #tpu.memory_space<vmem>>, %arg4: memref<1x32xf32, #tpu.memory_space<vmem>>, %arg5: memref<1x32xf32, #tpu.memory_space<vmem>>, %arg6: memref<1x32xf32, #tpu.memory_space<vmem>>, %arg7: memref<32x64xf32, #tpu.memory_space<vmem>>, %arg8: memref<1x64xf32, #tpu.memory_space<vmem>>, %arg9: memref<64x32xf32, #tpu.memory_space<vmem>>, %arg10: memref<1x32xf32, #tpu.memory_space<vmem>>, %arg11: memref<1x32xf32, #tpu.memory_space<vmem>>, %arg12: memref<1x32xf32, #tpu.memory_space<vmem>>, %arg13: memref<8x32xf32, #tpu.memory_space<vmem>>) attributes {dimension_semantics = [#tpu.dimension_semantics<parallel>], iteration_bounds = array<i64: 2>, scalar_prefetch = 0 : i64, scratch_operands = 0 : i64, tpu.core_type = #tpu.core_type<tc>, window_params = [{transform_indices = @transform_0, window_bounds = array<i64: 8, 32>}, {transform_indices = @transform_1, window_bounds = array<i64: 8, 32>}, {pipeline_mode = #tpu.pipeline_mode<synchronous>, transform_indices = @transform_2, window_bounds = array<i64: 32, 32>}, {pipeline_mode = #tpu.pipeline_mode<synchronous>, transform_indices = @transform_3, window_bounds = array<i64: 1, 32>}, {pipeline_mode = #tpu.pipeline_mode<synchronous>, transform_indices = @transform_4, window_bounds = array<i64: 1, 32>}, {pipeline_mode = #tpu.pipeline_mode<synchronous>, transform_indices = @transform_5, window_bounds = array<i64: 1, 32>}, {pipeline_mode = #tpu.pipeline_mode<synchronous>, transform_indices = @transform_6, window_bounds = array<i64: 32, 64>}, {pipeline_mode = #tpu.pipeline_mode<synchronous>, transform_indices = @transform_7, window_bounds = array<i64: 1, 64>}, {pipeline_mode = #tpu.pipeline_mode<synchronous>, transform_indices = @transform_8, window_bounds = array<i64: 64, 32>}, {pipeline_mode = #tpu.pipeline_mode<synchronous>, transform_indices = @transform_9, window_bounds = array<i64: 1, 32>}, {pipeline_mode = #tpu.pipeline_mode<synchronous>, transform_indices = @transform_10, window_bounds = array<i64: 1, 32>}, {pipeline_mode = #tpu.pipeline_mode<synchronous>, transform_indices = @transform_11, window_bounds = array<i64: 1, 32>}, {transform_indices = @transform_12, window_bounds = array<i64: 8, 32>}]} {
    %c0 = arith.constant 0 : index
    %c0_0 = arith.constant 0 : index
    %0 = vector.load %arg1[%c0, %c0_0] : memref<8x32xf32, #tpu.memory_space<vmem>>, vector<8x32xf32>
    %c0_1 = arith.constant 0 : index
    %c0_2 = arith.constant 0 : index
    %1 = vector.load %arg3[%c0_1, %c0_2] : memref<32x32xf32, #tpu.memory_space<vmem>>, vector<32x32xf32>
    %cst = arith.constant dense<0.000000e+00> : vector<8x32xf32>
    %2 = tpu.matmul %0, %1, %cst {dimension_numbers = #tpu.dot_dimension_numbers<[1], [0], [0], [1], [0, 0, 1, 1], [], []>} : vector<8x32xf32>, vector<32x32xf32>, vector<8x32xf32> -> vector<8x32xf32>
    %c0_3 = arith.constant 0 : index
    %c0_4 = arith.constant 0 : index
    %3 = vector.load %arg4[%c0_3, %c0_4] : memref<1x32xf32, #tpu.memory_space<vmem>>, vector<1x32xf32>
    %4 = vector.broadcast %3 : vector<1x32xf32> to vector<8x32xf32>
    %5 = arith.addf %2, %4 : vector<8x32xf32>
    %c0_5 = arith.constant 0 : index
    %c0_6 = arith.constant 0 : index
    %6 = vector.load %arg2[%c0_5, %c0_6] : memref<8x32xf32, #tpu.memory_space<vmem>>, vector<8x32xf32>
    %7 = arith.addf %6, %5 : vector<8x32xf32>
    %c0_7 = arith.constant 0 : index
    %c0_8 = arith.constant 0 : index
    %8 = vector.load %arg5[%c0_7, %c0_8] : memref<1x32xf32, #tpu.memory_space<vmem>>, vector<1x32xf32>
    %c0_9 = arith.constant 0 : index
    %c0_10 = arith.constant 0 : index
    %9 = vector.load %arg6[%c0_9, %c0_10] : memref<1x32xf32, #tpu.memory_space<vmem>>, vector<1x32xf32>
    %cst_11 = arith.constant dense<0.000000e+00> : vector<8xf32>
    %10 = vector.multi_reduction <add>, %7, %cst_11 [1] : vector<8x32xf32> to vector<8xf32>
    %11 = vector.shape_cast %10 : vector<8xf32> to vector<8x1xf32>
    %cst_12 = arith.constant 3.200000e+01 : f32
    %12 = vector.broadcast %cst_12 : f32 to vector<8x1xf32>
    %13 = arith.divf %11, %12 : vector<8x1xf32>
    %14 = vector.broadcast %13 : vector<8x1xf32> to vector<8x32xf32>
    %15 = arith.subf %7, %14 : vector<8x32xf32>
    %16 = arith.mulf %15, %15 : vector<8x32xf32>
    %cst_13 = arith.constant dense<0.000000e+00> : vector<8xf32>
    %17 = vector.multi_reduction <add>, %16, %cst_13 [1] : vector<8x32xf32> to vector<8xf32>
    %18 = vector.shape_cast %17 : vector<8xf32> to vector<8x1xf32>
    %cst_14 = arith.constant 3.200000e+01 : f32
    %19 = vector.broadcast %cst_14 : f32 to vector<8x1xf32>
    %20 = arith.divf %18, %19 : vector<8x1xf32>
    %21 = vector.broadcast %13 : vector<8x1xf32> to vector<8x32xf32>
    %22 = arith.subf %7, %21 : vector<8x32xf32>
    %cst_15 = arith.constant 9.99999974E-6 : f32
    %23 = vector.broadcast %cst_15 : f32 to vector<8x1xf32>
    %24 = arith.addf %20, %23 : vector<8x1xf32>
    %25 = math.rsqrt %24 : vector<8x1xf32>
    %26 = vector.broadcast %25 : vector<8x1xf32> to vector<8x32xf32>
    %27 = arith.mulf %22, %26 : vector<8x32xf32>
    %28 = vector.broadcast %8 : vector<1x32xf32> to vector<8x32xf32>
    %29 = arith.mulf %27, %28 : vector<8x32xf32>
    %30 = vector.broadcast %9 : vector<1x32xf32> to vector<8x32xf32>
    %31 = arith.addf %29, %30 : vector<8x32xf32>
    %c0_16 = arith.constant 0 : index
    %c0_17 = arith.constant 0 : index
    %32 = vector.load %arg7[%c0_16, %c0_17] : memref<32x64xf32, #tpu.memory_space<vmem>>, vector<32x64xf32>
    %cst_18 = arith.constant dense<0.000000e+00> : vector<8x64xf32>
    %33 = tpu.matmul %31, %32, %cst_18 {dimension_numbers = #tpu.dot_dimension_numbers<[1], [0], [0], [1], [0, 0, 1, 1], [], []>} : vector<8x32xf32>, vector<32x64xf32>, vector<8x64xf32> -> vector<8x64xf32>
    %c0_19 = arith.constant 0 : index
    %c0_20 = arith.constant 0 : index
    %34 = vector.load %arg8[%c0_19, %c0_20] : memref<1x64xf32, #tpu.memory_space<vmem>>, vector<1x64xf32>
    %35 = vector.broadcast %34 : vector<1x64xf32> to vector<8x64xf32>
    %36 = arith.addf %33, %35 : vector<8x64xf32>
    %cst_21 = arith.constant 0.000000e+00 : f32
    %37 = vector.broadcast %cst_21 : f32 to vector<8x64xf32>
    %38 = arith.maximumf %36, %37 : vector<8x64xf32>
    %c0_22 = arith.constant 0 : index
    %c0_23 = arith.constant 0 : index
    %39 = vector.load %arg9[%c0_22, %c0_23] : memref<64x32xf32, #tpu.memory_space<vmem>>, vector<64x32xf32>
    %cst_24 = arith.constant dense<0.000000e+00> : vector<8x32xf32>
    %40 = tpu.matmul %38, %39, %cst_24 {dimension_numbers = #tpu.dot_dimension_numbers<[1], [0], [0], [1], [0, 0, 1, 1], [], []>} : vector<8x64xf32>, vector<64x32xf32>, vector<8x32xf32> -> vector<8x32xf32>
    %c0_25 = arith.constant 0 : index
    %c0_26 = arith.constant 0 : index
    %41 = vector.load %arg10[%c0_25, %c0_26] : memref<1x32xf32, #tpu.memory_space<vmem>>, vector<1x32xf32>
    %42 = vector.broadcast %41 : vector<1x32xf32> to vector<8x32xf32>
    %43 = arith.addf %40, %42 : vector<8x32xf32>
    %44 = arith.addf %31, %43 : vector<8x32xf32>
    %c0_27 = arith.constant 0 : index
    %c0_28 = arith.constant 0 : index
    %45 = vector.load %arg11[%c0_27, %c0_28] : memref<1x32xf32, #tpu.memory_space<vmem>>, vector<1x32xf32>
    %c0_29 = arith.constant 0 : index
    %c0_30 = arith.constant 0 : index
    %46 = vector.load %arg12[%c0_29, %c0_30] : memref<1x32xf32, #tpu.memory_space<vmem>>, vector<1x32xf32>
    %cst_31 = arith.constant dense<0.000000e+00> : vector<8xf32>
    %47 = vector.multi_reduction <add>, %44, %cst_31 [1] : vector<8x32xf32> to vector<8xf32>
    %48 = vector.shape_cast %47 : vector<8xf32> to vector<8x1xf32>
    %cst_32 = arith.constant 3.200000e+01 : f32
    %49 = vector.broadcast %cst_32 : f32 to vector<8x1xf32>
    %50 = arith.divf %48, %49 : vector<8x1xf32>
    %51 = vector.broadcast %50 : vector<8x1xf32> to vector<8x32xf32>
    %52 = arith.subf %44, %51 : vector<8x32xf32>
    %53 = arith.mulf %52, %52 : vector<8x32xf32>
    %cst_33 = arith.constant dense<0.000000e+00> : vector<8xf32>
    %54 = vector.multi_reduction <add>, %53, %cst_33 [1] : vector<8x32xf32> to vector<8xf32>
    %55 = vector.shape_cast %54 : vector<8xf32> to vector<8x1xf32>
    %cst_34 = arith.constant 3.200000e+01 : f32
    %56 = vector.broadcast %cst_34 : f32 to vector<8x1xf32>
    %57 = arith.divf %55, %56 : vector<8x1xf32>
    %58 = vector.broadcast %50 : vector<8x1xf32> to vector<8x32xf32>
    %59 = arith.subf %44, %58 : vector<8x32xf32>
    %cst_35 = arith.constant 9.99999974E-6 : f32
    %60 = vector.broadcast %cst_35 : f32 to vector<8x1xf32>
    %61 = arith.addf %57, %60 : vector<8x1xf32>
    %62 = math.rsqrt %61 : vector<8x1xf32>
    %63 = vector.broadcast %62 : vector<8x1xf32> to vector<8x32xf32>
    %64 = arith.mulf %59, %63 : vector<8x32xf32>
    %65 = vector.broadcast %45 : vector<1x32xf32> to vector<8x32xf32>
    %66 = arith.mulf %64, %65 : vector<8x32xf32>
    %67 = vector.broadcast %46 : vector<1x32xf32> to vector<8x32xf32>
    %68 = arith.addf %66, %67 : vector<8x32xf32>
    %c0_36 = arith.constant 0 : index
    %c0_37 = arith.constant 0 : index
    %69 = vector.load %arg13[%c0_36, %c0_37] : memref<8x32xf32, #tpu.memory_space<vmem>>, vector<8x32xf32>
    tpu.vector_store %arg13[%c0_36, %c0_37], %68 {strides = array<i32>} : memref<8x32xf32, #tpu.memory_space<vmem>>, vector<8x32xf32>,
    return
  }
  func.func @transform_0(%arg0: i32) -> (i32, i32) {
    %c0_i32 = arith.constant 0 : i32
    %c0_i32_0 = arith.constant 0 : i32
    return %arg0, %c0_i32 : i32, i32
  }
  func.func @transform_1(%arg0: i32) -> (i32, i32) {
    %c0_i32 = arith.constant 0 : i32
    %c0_i32_0 = arith.constant 0 : i32
    return %arg0, %c0_i32 : i32, i32
  }
  func.func @transform_2(%arg0: i32) -> (i32, i32) {
    %c0_i32 = arith.constant 0 : i32
    %c0_i32_0 = arith.constant 0 : i32
    %c0_i32_1 = arith.constant 0 : i32
    return %c0_i32, %c0_i32_0 : i32, i32
  }
  func.func @transform_3(%arg0: i32) -> (i32, i32) {
    %c0_i32 = arith.constant 0 : i32
    %c0_i32_0 = arith.constant 0 : i32
    %c0_i32_1 = arith.constant 0 : i32
    return %c0_i32, %c0_i32_0 : i32, i32
  }
  func.func @transform_4(%arg0: i32) -> (i32, i32) {
    %c0_i32 = arith.constant 0 : i32
    %c0_i32_0 = arith.constant 0 : i32
    %c0_i32_1 = arith.constant 0 : i32
    return %c0_i32, %c0_i32_0 : i32, i32
  }
  func.func @transform_5(%arg0: i32) -> (i32, i32) {
    %c0_i32 = arith.constant 0 : i32
    %c0_i32_0 = arith.constant 0 : i32
    %c0_i32_1 = arith.constant 0 : i32
    return %c0_i32, %c0_i32_0 : i32, i32
  }
  func.func @transform_6(%arg0: i32) -> (i32, i32) {
    %c0_i32 = arith.constant 0 : i32
    %c0_i32_0 = arith.constant 0 : i32
    %c0_i32_1 = arith.constant 0 : i32
    return %c0_i32, %c0_i32_0 : i32, i32
  }
  func.func @transform_7(%arg0: i32) -> (i32, i32) {
    %c0_i32 = arith.constant 0 : i32
    %c0_i32_0 = arith.constant 0 : i32
    %c0_i32_1 = arith.constant 0 : i32
    return %c0_i32, %c0_i32_0 : i32, i32
  }
  func.func @transform_8(%arg0: i32) -> (i32, i32) {
    %c0_i32 = arith.constant 0 : i32
    %c0_i32_0 = arith.constant 0 : i32
    %c0_i32_1 = arith.constant 0 : i32
    return %c0_i32, %c0_i32_0 : i32, i32
  }
  func.func @transform_9(%arg0: i32) -> (i32, i32) {
    %c0_i32 = arith.constant 0 : i32
    %c0_i32_0 = arith.constant 0 : i32
    %c0_i32_1 = arith.constant 0 : i32
    return %c0_i32, %c0_i32_0 : i32, i32
  }
  func.func @transform_10(%arg0: i32) -> (i32, i32) {
    %c0_i32 = arith.constant 0 : i32
    %c0_i32_0 = arith.constant 0 : i32
    %c0_i32_1 = arith.constant 0 : i32
    return %c0_i32, %c0_i32_0 : i32, i32
  }
  func.func @transform_11(%arg0: i32) -> (i32, i32) {
    %c0_i32 = arith.constant 0 : i32
    %c0_i32_0 = arith.constant 0 : i32
    %c0_i32_1 = arith.constant 0 : i32
    return %c0_i32, %c0_i32_0 : i32, i32
  }
  func.func @transform_12(%arg0: i32) -> (i32, i32) {
    %c0_i32 = arith.constant 0 : i32
    %c0_i32_0 = arith.constant 0 : i32
    return %arg0, %c0_i32 : i32, i32
  }
}

module attributes {stable_mosaic.version = 11 : i64} {
  func.func @qkv_kernel(%arg0: i32, %arg1: memref<8x32xf32, #tpu.memory_space<vmem>>, %arg2: memref<32x96xf32, #tpu.memory_space<vmem>>, %arg3: memref<1x96xf32, #tpu.memory_space<vmem>>, %arg4: memref<8x32xf32, #tpu.memory_space<vmem>>, %arg5: memref<8x32xf32, #tpu.memory_space<vmem>>, %arg6: memref<8x32xf32, #tpu.memory_space<vmem>>) attributes {dimension_semantics = [#tpu.dimension_semantics<parallel>], iteration_bounds = array<i64: 2>, scalar_prefetch = 0 : i64, scratch_operands = 0 : i64, tpu.core_type = #tpu.core_type<tc>, window_params = [{transform_indices = @transform_0, window_bounds = array<i64: 8, 32>}, {pipeline_mode = #tpu.pipeline_mode<synchronous>, transform_indices = @transform_1, window_bounds = array<i64: 32, 96>}, {pipeline_mode = #tpu.pipeline_mode<synchronous>, transform_indices = @transform_2, window_bounds = array<i64: 1, 96>}, {transform_indices = @transform_3, window_bounds = array<i64: 8, 32>}, {transform_indices = @transform_4, window_bounds = array<i64: 8, 32>}, {transform_indices = @transform_5, window_bounds = array<i64: 8, 32>}]} {
    %c0 = arith.constant 0 : index
    %c0_0 = arith.constant 0 : index
    %0 = vector.load %arg1[%c0, %c0_0] : memref<8x32xf32, #tpu.memory_space<vmem>>, vector<8x32xf32>
    %c0_1 = arith.constant 0 : index
    %c0_2 = arith.constant 0 : index
    %1 = vector.load %arg2[%c0_1, %c0_2] : memref<32x96xf32, #tpu.memory_space<vmem>>, vector<32x96xf32>
    %cst = arith.constant dense<0.000000e+00> : vector<8x96xf32>
    %2 = tpu.matmul %0, %1, %cst {dimension_numbers = #tpu.dot_dimension_numbers<[1], [0], [0], [1], [0, 0, 1, 1], [], []>} : vector<8x32xf32>, vector<32x96xf32>, vector<8x96xf32> -> vector<8x96xf32>
    %c0_3 = arith.constant 0 : index
    %c0_4 = arith.constant 0 : index
    %3 = vector.load %arg3[%c0_3, %c0_4] : memref<1x96xf32, #tpu.memory_space<vmem>>, vector<1x96xf32>
    %4 = vector.broadcast %3 : vector<1x96xf32> to vector<8x96xf32>
    %5 = arith.addf %2, %4 : vector<8x96xf32>
    %6 = vector.extract_strided_slice %5 {offsets = [0, 0], sizes = [8, 32], strides = [1, 1]} : vector<8x96xf32> to vector<8x32xf32>
    %c0_5 = arith.constant 0 : index
    %c0_6 = arith.constant 0 : index
    %7 = vector.load %arg4[%c0_5, %c0_6] : memref<8x32xf32, #tpu.memory_space<vmem>>, vector<8x32xf32>
    tpu.vector_store %arg4[%c0_5, %c0_6], %6 {strides = array<i32>} : memref<8x32xf32, #tpu.memory_space<vmem>>, vector<8x32xf32>,
    %8 = vector.extract_strided_slice %5 {offsets = [0, 32], sizes = [8, 32], strides = [1, 1]} : vector<8x96xf32> to vector<8x32xf32>
    %c0_7 = arith.constant 0 : index
    %c0_8 = arith.constant 0 : index
    %9 = vector.load %arg5[%c0_7, %c0_8] : memref<8x32xf32, #tpu.memory_space<vmem>>, vector<8x32xf32>
    tpu.vector_store %arg5[%c0_7, %c0_8], %8 {strides = array<i32>} : memref<8x32xf32, #tpu.memory_space<vmem>>, vector<8x32xf32>,
    %10 = vector.extract_strided_slice %5 {offsets = [0, 64], sizes = [8, 32], strides = [1, 1]} : vector<8x96xf32> to vector<8x32xf32>
    %c0_9 = arith.constant 0 : index
    %c0_10 = arith.constant 0 : index
    %11 = vector.load %arg6[%c0_9, %c0_10] : memref<8x32xf32, #tpu.memory_space<vmem>>, vector<8x32xf32>
    tpu.vector_store %arg6[%c0_9, %c0_10], %10 {strides = array<i32>} : memref<8x32xf32, #tpu.memory_space<vmem>>, vector<8x32xf32>,
    return
  }
  func.func @transform_0(%arg0: i32) -> (i32, i32) {
    %c0_i32 = arith.constant 0 : i32
    %c0_i32_0 = arith.constant 0 : i32
    return %arg0, %c0_i32 : i32, i32
  }
  func.func @transform_1(%arg0: i32) -> (i32, i32) {
    %c0_i32 = arith.constant 0 : i32
    %c0_i32_0 = arith.constant 0 : i32
    %c0_i32_1 = arith.constant 0 : i32
    return %c0_i32, %c0_i32_0 : i32, i32
  }
  func.func @transform_2(%arg0: i32) -> (i32, i32) {
    %c0_i32 = arith.constant 0 : i32
    %c0_i32_0 = arith.constant 0 : i32
    %c0_i32_1 = arith.constant 0 : i32
    return %c0_i32, %c0_i32_0 : i32, i32
  }
  func.func @transform_3(%arg0: i32) -> (i32, i32) {
    %c0_i32 = arith.constant 0 : i32
    %c0_i32_0 = arith.constant 0 : i32
    return %arg0, %c0_i32 : i32, i32
  }
  func.func @transform_4(%arg0: i32) -> (i32, i32) {
    %c0_i32 = arith.constant 0 : i32
    %c0_i32_0 = arith.constant 0 : i32
    return %arg0, %c0_i32 : i32, i32
  }
  func.func @transform_5(%arg0: i32) -> (i32, i32) {
    %c0_i32 = arith.constant 0 : i32
    %c0_i32_0 = arith.constant 0 : i32
    return %arg0, %c0_i32 : i32, i32
  }
}

module attributes {stable_mosaic.version = 11 : i64} {
  func.func @attention_kernel(%arg0: i32, %arg1: i32, %arg2: memref<1x8x32xf32, #tpu.memory_space<vmem>>, %arg3: memref<1x8x32xf32, #tpu.memory_space<vmem>>, %arg4: memref<1x8x32xf32, #tpu.memory_space<vmem>>, %arg5: memref<1x8x32xf32, #tpu.memory_space<vmem>>) attributes {dimension_semantics = [#tpu.dimension_semantics<parallel>, #tpu.dimension_semantics<parallel>], iteration_bounds = array<i64: 2, 1>, scalar_prefetch = 0 : i64, scratch_operands = 0 : i64, tpu.core_type = #tpu.core_type<tc>, window_params = [{transform_indices = @transform_0, window_bounds = array<i64: 1, 8, 32>}, {transform_indices = @transform_1, window_bounds = array<i64: 1, 8, 32>}, {transform_indices = @transform_2, window_bounds = array<i64: 1, 8, 32>}, {transform_indices = @transform_3, window_bounds = array<i64: 1, 8, 32>}]} {
    %c0 = arith.constant 0 : index
    %c0_0 = arith.constant 0 : index
    %c0_1 = arith.constant 0 : index
    %0 = vector.load %arg2[%c0, %c0_0, %c0_1] : memref<1x8x32xf32, #tpu.memory_space<vmem>>, vector<1x8x32xf32>
    %1 = vector.shape_cast %0 : vector<1x8x32xf32> to vector<8x32xf32>
    %c0_2 = arith.constant 0 : index
    %c0_3 = arith.constant 0 : index
    %c0_4 = arith.constant 0 : index
    %2 = vector.load %arg3[%c0_2, %c0_3, %c0_4] : memref<1x8x32xf32, #tpu.memory_space<vmem>>, vector<1x8x32xf32>
    %3 = vector.shape_cast %2 : vector<1x8x32xf32> to vector<8x32xf32>
    %c0_5 = arith.constant 0 : index
    %c0_6 = arith.constant 0 : index
    %c0_7 = arith.constant 0 : index
    %4 = vector.load %arg4[%c0_5, %c0_6, %c0_7] : memref<1x8x32xf32, #tpu.memory_space<vmem>>, vector<1x8x32xf32>
    %5 = vector.shape_cast %4 : vector<1x8x32xf32> to vector<8x32xf32>
    %6 = vector.extract_strided_slice %1 {offsets = [0, 0], sizes = [8, 8], strides = [1, 1]} : vector<8x32xf32> to vector<8x8xf32>
    %7 = vector.extract_strided_slice %3 {offsets = [0, 0], sizes = [8, 8], strides = [1, 1]} : vector<8x32xf32> to vector<8x8xf32>
    %8 = vector.extract_strided_slice %5 {offsets = [0, 0], sizes = [8, 8], strides = [1, 1]} : vector<8x32xf32> to vector<8x8xf32>
    %cst = arith.constant dense<0.000000e+00> : vector<8x8xf32>
    %9 = tpu.matmul %6, %7, %cst {dimension_numbers = #tpu.dot_dimension_numbers<[1], [1], [0], [0], [0, 0, 1, 0], [], []>} : vector<8x8xf32>, vector<8x8xf32>, vector<8x8xf32> -> vector<8x8xf32>
    %cst_8 = arith.constant dense<0xFF800000> : vector<8xf32>
    %10 = vector.multi_reduction <maximumf>, %9, %cst_8 [1] : vector<8x8xf32> to vector<8xf32>
    %11 = vector.shape_cast %10 : vector<8xf32> to vector<8x1xf32>
    %12 = vector.broadcast %11 : vector<8x1xf32> to vector<8x8xf32>
    %13 = arith.subf %9, %12 : vector<8x8xf32>
    %14 = math.exp %13 : vector<8x8xf32>
    %cst_9 = arith.constant dense<0.000000e+00> : vector<8xf32>
    %15 = vector.multi_reduction <add>, %14, %cst_9 [1] : vector<8x8xf32> to vector<8xf32>
    %16 = vector.shape_cast %15 : vector<8xf32> to vector<8x1xf32>
    %cst_10 = arith.constant dense<0.000000e+00> : vector<8x8xf32>
    %17 = tpu.matmul %14, %8, %cst_10 {dimension_numbers = #tpu.dot_dimension_numbers<[1], [0], [0], [1], [0, 0, 1, 1], [], []>} : vector<8x8xf32>, vector<8x8xf32>, vector<8x8xf32> -> vector<8x8xf32>
    %18 = tpu.reciprocal %16 {approx = true} : vector<8x1xf32> -> vector<8x1xf32>
    %19 = vector.broadcast %18 : vector<8x1xf32> to vector<8x8xf32>
    %20 = arith.mulf %17, %19 : vector<8x8xf32>
    %21 = vector.extract_strided_slice %1 {offsets = [0, 8], sizes = [8, 8], strides = [1, 1]} : vector<8x32xf32> to vector<8x8xf32>
    %22 = vector.extract_strided_slice %3 {offsets = [0, 8], sizes = [8, 8], strides = [1, 1]} : vector<8x32xf32> to vector<8x8xf32>
    %23 = vector.extract_strided_slice %5 {offsets = [0, 8], sizes = [8, 8], strides = [1, 1]} : vector<8x32xf32> to vector<8x8xf32>
    %cst_11 = arith.constant dense<0.000000e+00> : vector<8x8xf32>
    %24 = tpu.matmul %21, %22, %cst_11 {dimension_numbers = #tpu.dot_dimension_numbers<[1], [1], [0], [0], [0, 0, 1, 0], [], []>} : vector<8x8xf32>, vector<8x8xf32>, vector<8x8xf32> -> vector<8x8xf32>
    %cst_12 = arith.constant dense<0xFF800000> : vector<8xf32>
    %25 = vector.multi_reduction <maximumf>, %24, %cst_12 [1] : vector<8x8xf32> to vector<8xf32>
    %26 = vector.shape_cast %25 : vector<8xf32> to vector<8x1xf32>
    %27 = vector.broadcast %26 : vector<8x1xf32> to vector<8x8xf32>
    %28 = arith.subf %24, %27 : vector<8x8xf32>
    %29 = math.exp %28 : vector<8x8xf32>
    %cst_13 = arith.constant dense<0.000000e+00> : vector<8xf32>
    %30 = vector.multi_reduction <add>, %29, %cst_13 [1] : vector<8x8xf32> to vector<8xf32>
    %31 = vector.shape_cast %30 : vector<8xf32> to vector<8x1xf32>
    %cst_14 = arith.constant dense<0.000000e+00> : vector<8x8xf32>
    %32 = tpu.matmul %29, %23, %cst_14 {dimension_numbers = #tpu.dot_dimension_numbers<[1], [0], [0], [1], [0, 0, 1, 1], [], []>} : vector<8x8xf32>, vector<8x8xf32>, vector<8x8xf32> -> vector<8x8xf32>
    %33 = tpu.reciprocal %31 {approx = true} : vector<8x1xf32> -> vector<8x1xf32>
    %34 = vector.broadcast %33 : vector<8x1xf32> to vector<8x8xf32>
    %35 = arith.mulf %32, %34 : vector<8x8xf32>
    %36 = vector.extract_strided_slice %1 {offsets = [0, 16], sizes = [8, 8], strides = [1, 1]} : vector<8x32xf32> to vector<8x8xf32>
    %37 = vector.extract_strided_slice %3 {offsets = [0, 16], sizes = [8, 8], strides = [1, 1]} : vector<8x32xf32> to vector<8x8xf32>
    %38 = vector.extract_strided_slice %5 {offsets = [0, 16], sizes = [8, 8], strides = [1, 1]} : vector<8x32xf32> to vector<8x8xf32>
    %cst_15 = arith.constant dense<0.000000e+00> : vector<8x8xf32>
    %39 = tpu.matmul %36, %37, %cst_15 {dimension_numbers = #tpu.dot_dimension_numbers<[1], [1], [0], [0], [0, 0, 1, 0], [], []>} : vector<8x8xf32>, vector<8x8xf32>, vector<8x8xf32> -> vector<8x8xf32>
    %cst_16 = arith.constant dense<0xFF800000> : vector<8xf32>
    %40 = vector.multi_reduction <maximumf>, %39, %cst_16 [1] : vector<8x8xf32> to vector<8xf32>
    %41 = vector.shape_cast %40 : vector<8xf32> to vector<8x1xf32>
    %42 = vector.broadcast %41 : vector<8x1xf32> to vector<8x8xf32>
    %43 = arith.subf %39, %42 : vector<8x8xf32>
    %44 = math.exp %43 : vector<8x8xf32>
    %cst_17 = arith.constant dense<0.000000e+00> : vector<8xf32>
    %45 = vector.multi_reduction <add>, %44, %cst_17 [1] : vector<8x8xf32> to vector<8xf32>
    %46 = vector.shape_cast %45 : vector<8xf32> to vector<8x1xf32>
    %cst_18 = arith.constant dense<0.000000e+00> : vector<8x8xf32>
    %47 = tpu.matmul %44, %38, %cst_18 {dimension_numbers = #tpu.dot_dimension_numbers<[1], [0], [0], [1], [0, 0, 1, 1], [], []>} : vector<8x8xf32>, vector<8x8xf32>, vector<8x8xf32> -> vector<8x8xf32>
    %48 = tpu.reciprocal %46 {approx = true} : vector<8x1xf32> -> vector<8x1xf32>
    %49 = vector.broadcast %48 : vector<8x1xf32> to vector<8x8xf32>
    %50 = arith.mulf %47, %49 : vector<8x8xf32>
    %51 = vector.extract_strided_slice %1 {offsets = [0, 24], sizes = [8, 8], strides = [1, 1]} : vector<8x32xf32> to vector<8x8xf32>
    %52 = vector.extract_strided_slice %3 {offsets = [0, 24], sizes = [8, 8], strides = [1, 1]} : vector<8x32xf32> to vector<8x8xf32>
    %53 = vector.extract_strided_slice %5 {offsets = [0, 24], sizes = [8, 8], strides = [1, 1]} : vector<8x32xf32> to vector<8x8xf32>
    %cst_19 = arith.constant dense<0.000000e+00> : vector<8x8xf32>
    %54 = tpu.matmul %51, %52, %cst_19 {dimension_numbers = #tpu.dot_dimension_numbers<[1], [1], [0], [0], [0, 0, 1, 0], [], []>} : vector<8x8xf32>, vector<8x8xf32>, vector<8x8xf32> -> vector<8x8xf32>
    %cst_20 = arith.constant dense<0xFF800000> : vector<8xf32>
    %55 = vector.multi_reduction <maximumf>, %54, %cst_20 [1] : vector<8x8xf32> to vector<8xf32>
    %56 = vector.shape_cast %55 : vector<8xf32> to vector<8x1xf32>
    %57 = vector.broadcast %56 : vector<8x1xf32> to vector<8x8xf32>
    %58 = arith.subf %54, %57 : vector<8x8xf32>
    %59 = math.exp %58 : vector<8x8xf32>
    %cst_21 = arith.constant dense<0.000000e+00> : vector<8xf32>
    %60 = vector.multi_reduction <add>, %59, %cst_21 [1] : vector<8x8xf32> to vector<8xf32>
    %61 = vector.shape_cast %60 : vector<8xf32> to vector<8x1xf32>
    %cst_22 = arith.constant dense<0.000000e+00> : vector<8x8xf32>
    %62 = tpu.matmul %59, %53, %cst_22 {dimension_numbers = #tpu.dot_dimension_numbers<[1], [0], [0], [1], [0, 0, 1, 1], [], []>} : vector<8x8xf32>, vector<8x8xf32>, vector<8x8xf32> -> vector<8x8xf32>
    %63 = tpu.reciprocal %61 {approx = true} : vector<8x1xf32> -> vector<8x1xf32>
    %64 = vector.broadcast %63 : vector<8x1xf32> to vector<8x8xf32>
    %65 = arith.mulf %62, %64 : vector<8x8xf32>
    %66 = tpu.concatenate %20, %35, %50, %65 in 1 : vector<8x8xf32>, vector<8x8xf32>, vector<8x8xf32>, vector<8x8xf32> -> vector<8x32xf32>
    %c0_23 = arith.constant 0 : index
    %c0_24 = arith.constant 0 : index
    %c0_25 = arith.constant 0 : index
    %67 = vector.load %arg5[%c0_23, %c0_24, %c0_25] : memref<1x8x32xf32, #tpu.memory_space<vmem>>, vector<1x8x32xf32>
    %68 = vector.shape_cast %67 : vector<1x8x32xf32> to vector<8x32xf32>
    %69 = vector.shape_cast %66 : vector<8x32xf32> to vector<1x8x32xf32>
    tpu.vector_store %arg5[%c0_23, %c0_24, %c0_25], %69 {strides = array<i32>} : memref<1x8x32xf32, #tpu.memory_space<vmem>>, vector<1x8x32xf32>,
    return
  }
  func.func @transform_0(%arg0: i32, %arg1: i32) -> (i32, i32, i32) {
    %c0_i32 = arith.constant 0 : i32
    %c0_i32_0 = arith.constant 0 : i32
    return %arg0, %c0_i32, %arg1 : i32, i32, i32
  }
  func.func @transform_1(%arg0: i32, %arg1: i32) -> (i32, i32, i32) {
    %c0_i32 = arith.constant 0 : i32
    %c0_i32_0 = arith.constant 0 : i32
    return %arg0, %c0_i32, %arg1 : i32, i32, i32
  }
  func.func @transform_2(%arg0: i32, %arg1: i32) -> (i32, i32, i32) {
    %c0_i32 = arith.constant 0 : i32
    %c0_i32_0 = arith.constant 0 : i32
    return %arg0, %c0_i32, %arg1 : i32, i32, i32
  }
  func.func @transform_3(%arg0: i32, %arg1: i32) -> (i32, i32, i32) {
    %c0_i32 = arith.constant 0 : i32
    %c0_i32_0 = arith.constant 0 : i32
    return %arg0, %c0_i32, %arg1 : i32, i32, i32
  }
}

</mosaic_0001>

<llo_original>
// kernel: encoder_layer.3
$region0: #{encoder_layer.3}
  #allocation0 [shape = 'u32[]', space=smem, size = 0x4, offset = 0x4, fixed_abs, tag = 'smem constant byte address 0x4 - core index']
  #allocation1 [shape = 'u32[144,128]{1,0:T(1,128)}', space=vmem, size = 0x12000, scoped, tag = 'internal scratch']
  %s0 = inlined_call_operand.hbm [shape: f32[16,32], index: 0, kind: input, shape index: {}]
  %s1 = inlined_call_operand.vmem [shape: f32[32,96], index: 1, kind: input, shape index: {}]
  %s2 = inlined_call_operand.vmem [shape: f32[1,96], index: 2, kind: input, shape index: {}]
  %s3 = inlined_call_operand.vmem [shape: f32[16,32], index: 3, kind: output, shape index: {0}]
  %s4 = inlined_call_operand.vmem [shape: f32[16,32], index: 4, kind: output, shape index: {1}]
  %s5 = inlined_call_operand.vmem [shape: f32[16,32], index: 5, kind: output, shape index: {2}]
  %6 = xla_tuple %s3, %s4, %s5
  %s7 = sld [smem:[#allocation0]]
  $region65: #{encoder_layer.3} parent=0
    _
  %s9 = ssub.s32 1, %s7
  %s10 = scalar_select 0, %s9, %s7
  $region1: #{encoder_layer.3} parent=0
    #allocation2 [shape = 'u8[8192]{0}', space=vmem, size = 0x2000, scoped, tag = 'input window, operand 0']
    #allocation3 [shape = 's32[2]{0}', space=sflag, size = 0x8, scoped, tag = 'scoped memory for encoder_layer.3']
    %11 = vsyncpa [#allocation3], 0
    %s12 = scalar_lea.sflag [#allocation3], 1
    %13 = vsyncpa %s12, 0
    loop: start=0, step=1, limit=4
    $region2: #{encoder_layer.3} parent=1 // loop_pre_header
      _
    $region3: #{encoder_layer.3} parent=1 // loop_header
      %s15 = sphi 0, %s19
      %p16 = scmp.ge.s32.totalorder %s15, 4
      %s25 = sphi 0, %s27
      %s28 = sphi 0, %s25
      %s29 = sphi 0, %s28
      %s45 = sphi 0, %s29
      %s49 = sphi 0, %s49
      %s51 = sphi 0, %s49
      %s52 = sphi 0, %s51
      %s66 = sphi 0, %s52
      %s70 = sphi 0, %s70
      %s72 = sphi 0, %s70
      %s73 = sphi 0, %s72
      %s87 = sphi 0, %s73
      %s93 = sphi 0, %s95
      %s96 = sphi 0, %s93
      %s97 = sphi 0, %s96
      %s113 = sphi 0, %s97
      %s119 = sphi 0, %s121
      %s122 = sphi 0, %s119
      %s123 = sphi 0, %s122
      %s139 = sphi 0, %s123
      %s145 = sphi 0, %s147
      %s148 = sphi 0, %s145
      %s149 = sphi 0, %s148
      %s165 = sphi 0, %s149
    $region4: #{encoder_layer.3} parent=1 // loop_header_branch
      %18 = sbr.rel (%p16) target = $region8
    $region5: #{encoder_layer.3} parent=1 // loop_body
      %s20 = ssub.s32 %s15, 1
      %s21 = ssub.s32 %s15, 2
      %s22 = sadd.s32 %s15, 1
      %s23 = ssub.s32 %s15, %s22
      %p24 = scmp.eq.s32.totalorder %s23, 0
      %s26 = sadd.s32 %s25, 1
      %s27 = scalar_select %p24, %s25, %s26
      %p30 = pneg %p24
      %p31 = scmp.eq.s32.totalorder %s15, 1
      %p32 = por %p30, %p31
      %p33 = scmp.ne.s32.totalorder %s25, %s28
      %p34 = scmp.eq.s32.totalorder %s15, 0
      %p35 = por %p33, %p34
      %p36 = scmp.ne.s32.totalorder %s25, %s28
      %p37 = scmp.eq.s32.totalorder %s20, 1
      %p38 = por %p36, %p37
      %p39 = scmp.ne.s32.totalorder %s28, %s29
      %p40 = scmp.eq.s32.totalorder %s20, 0
      %p41 = por %p39, %p40
      %p42 = scmp.ne.s32.totalorder %s28, %s29
      %p43 = scmp.eq.s32.totalorder %s21, 1
      %p44 = por %p42, %p43
      %p46 = scmp.ne.s32.totalorder %s29, %s45
      %p47 = scmp.eq.s32.totalorder %s21, 0
      %p48 = por %p46, %p47
      %s50 = sadd.s32 %s49, 1
      %p53 = scmp.eq.s32.totalorder %s15, 1
      %p54 = scmp.ne.s32.totalorder %s49, %s51
      %p55 = scmp.eq.s32.totalorder %s15, 0
      %p56 = por %p54, %p55
      %p57 = scmp.ne.s32.totalorder %s49, %s51
      %p58 = scmp.eq.s32.totalorder %s20, 1
      %p59 = por %p57, %p58
      %p60 = scmp.ne.s32.totalorder %s51, %s52
      %p61 = scmp.eq.s32.totalorder %s20, 0
      %p62 = por %p60, %p61
      %p63 = scmp.ne.s32.totalorder %s51, %s52
      %p64 = scmp.eq.s32.totalorder %s21, 1
      %p65 = por %p63, %p64
      %p67 = scmp.ne.s32.totalorder %s52, %s66
      %p68 = scmp.eq.s32.totalorder %s21, 0
      %p69 = por %p67, %p68
      %s71 = sadd.s32 %s70, 1
      %p74 = scmp.eq.s32.totalorder %s15, 1
      %p75 = scmp.ne.s32.totalorder %s70, %s72
      %p76 = scmp.eq.s32.totalorder %s15, 0
      %p77 = por %p75, %p76
      %p78 = scmp.ne.s32.totalorder %s70, %s72
      %p79 = scmp.eq.s32.totalorder %s20, 1
      %p80 = por %p78, %p79
      %p81 = scmp.ne.s32.totalorder %s72, %s73
      %p82 = scmp.eq.s32.totalorder %s20, 0
      %p83 = por %p81, %p82
      %p84 = scmp.ne.s32.totalorder %s72, %s73
      %p85 = scmp.eq.s32.totalorder %s21, 1
      %p86 = por %p84, %p85
      %p88 = scmp.ne.s32.totalorder %s73, %s87
      %p89 = scmp.eq.s32.totalorder %s21, 0
      %p90 = por %p88, %p89
      %s91 = ssub.s32 %s15, %s22
      %p92 = scmp.eq.s32.totalorder %s91, 0
      %s94 = sadd.s32 %s93, 1
      %s95 = scalar_select %p92, %s93, %s94
      %p98 = pneg %p92
      %p99 = scmp.eq.s32.totalorder %s15, 1
      %p100 = por %p98, %p99
      %p101 = scmp.ne.s32.totalorder %s93, %s96
      %p102 = scmp.eq.s32.totalorder %s15, 0
      %p103 = por %p101, %p102
      %p104 = scmp.ne.s32.totalorder %s93, %s96
      %p105 = scmp.eq.s32.totalorder %s20, 1
      %p106 = por %p104, %p105
      %p107 = scmp.ne.s32.totalorder %s96, %s97
      %p108 = scmp.eq.s32.totalorder %s20, 0
      %p109 = por %p107, %p108
      %p110 = scmp.ne.s32.totalorder %s96, %s97
      %p111 = scmp.eq.s32.totalorder %s21, 1
      %p112 = por %p110, %p111
      %p114 = scmp.ne.s32.totalorder %s97, %s113
      %p115 = scmp.eq.s32.totalorder %s21, 0
      %p116 = por %p114, %p115
      %s117 = ssub.s32 %s15, %s22
      %p118 = scmp.eq.s32.totalorder %s117, 0
      %s120 = sadd.s32 %s119, 1
      %s121 = scalar_select %p118, %s119, %s120
      %p124 = pneg %p118
      %p125 = scmp.eq.s32.totalorder %s15, 1
      %p126 = por %p124, %p125
      %p127 = scmp.ne.s32.totalorder %s119, %s122
      %p128 = scmp.eq.s32.totalorder %s15, 0
      %p129 = por %p127, %p128
      %p130 = scmp.ne.s32.totalorder %s119, %s122
      %p131 = scmp.eq.s32.totalorder %s20, 1
      %p132 = por %p130, %p131
      %p133 = scmp.ne.s32.totalorder %s122, %s123
      %p134 = scmp.eq.s32.totalorder %s20, 0
      %p135 = por %p133, %p134
      %p136 = scmp.ne.s32.totalorder %s122, %s123
      %p137 = scmp.eq.s32.totalorder %s21, 1
      %p138 = por %p136, %p137
      %p140 = scmp.ne.s32.totalorder %s123, %s139
      %p141 = scmp.eq.s32.totalorder %s21, 0
      %p142 = por %p140, %p141
      %s143 = ssub.s32 %s15, %s22
      %p144 = scmp.eq.s32.totalorder %s143, 0
      %s146 = sadd.s32 %s145, 1
      %s147 = scalar_select %p144, %s145, %s146
      %p150 = pneg %p144
      %p151 = scmp.eq.s32.totalorder %s15, 1
      %p152 = por %p150, %p151
      %p153 = scmp.ne.s32.totalorder %s145, %s148
      %p154 = scmp.eq.s32.totalorder %s15, 0
      %p155 = por %p153, %p154
      %p156 = scmp.ne.s32.totalorder %s145, %s148
      %p157 = scmp.eq.s32.totalorder %s20, 1
      %p158 = por %p156, %p157
      %p159 = scmp.ne.s32.totalorder %s148, %s149
      %p160 = scmp.eq.s32.totalorder %s20, 0
      %p161 = por %p159, %p160
      %p162 = scmp.ne.s32.totalorder %s148, %s149
      %p163 = scmp.eq.s32.totalorder %s21, 1
      %p164 = por %p162, %p163
      %p166 = scmp.ne.s32.totalorder %s149, %s165
      %p167 = scmp.eq.s32.totalorder %s21, 0
      %p168 = por %p166, %p167
      %p169 = scmp.le.s32.totalorder 1, %s15
      %p170 = scmp.lt.s32.totalorder %s15, 3
      %p171 = pnand %p169, %p170
      %p172 = pneg %p171
      // Predicated region
      $region9: #{encoder_layer.3} parent=5 // pred_check
        _
      $region10: #{encoder_layer.3} parent=5 // pred_check_branch
        %174 = sbr.rel (%p171) target = $region12
      $region11: #{encoder_layer.3} parent=5 // pred_region
        %s175 = ssub.s32 %s15, 1
        // Predicated region
        $region13: #{encoder_layer.3} parent=11 // pred_check
          %p176 = pneg %p62
        $region14: #{encoder_layer.3} parent=11 // pred_check_branch
          %178 = sbr.rel (%p176) target = $region16
        $region15: #{encoder_layer.3} parent=11 // pred_region
          _
        $region16: #{encoder_layer.3} parent=11 // pred_fallthru
          _
        // Predicated region
        $region17: #{encoder_layer.3} parent=11 // pred_check
          %p179 = pneg %p83
        $region18: #{encoder_layer.3} parent=11 // pred_check_branch
          %181 = sbr.rel (%p179) target = $region20
        $region19: #{encoder_layer.3} parent=11 // pred_region
          _
        $region20: #{encoder_layer.3} parent=11 // pred_fallthru
          _
      $region12: #{encoder_layer.3} parent=5 // pred_fallthru
        _
      %p182 = scmp.lt.s32.totalorder %s15, 2
      // Predicated region
      $region21: #{encoder_layer.3} parent=5 // pred_check
        %p183 = pneg %p182
      $region22: #{encoder_layer.3} parent=5 // pred_check_branch
        %185 = sbr.rel (%p183) target = $region24
      $region23: #{encoder_layer.3} parent=5 // pred_region
        // Predicated region
        $region25: #{encoder_layer.3} parent=23 // pred_check
          %p186 = pneg %p35
        $region26: #{encoder_layer.3} parent=23 // pred_check_branch
          %188 = sbr.rel (%p186) target = $region28
        $region27: #{encoder_layer.3} parent=23 // pred_region
          %s189 = sand.u32 %s25, 1
          %s190 = scalar_lea.sflag [#allocation3], %s189
          %s191 = sand.u32 %s25, 1
          %s192 = smul.addr %s191, 8
          %s193 = scalar_lea.vmem [#allocation2], %s192
          %s195 = ssub.s32 128, 128
          %196 = vsyncadd %s190, %s195
          %s197 = smul.addr %s15, 128
          %s198 = scalar_lea.hbm %s0, %s197
          %s200 = sshll.u32 %s193, 4
          %s201 = int_to_ptr.vmem [resolvable:$true] %s200
          %203 = dma.hbm_to_vmem [thread:$0]  %s198, 128, %s201, %s190
        $region28: #{encoder_layer.3} parent=23 // pred_fallthru
          _
      $region24: #{encoder_layer.3} parent=5 // pred_fallthru
        _
      %p204 = scmp.le.s32.totalorder 1, %s15
      %p205 = scmp.lt.s32.totalorder %s15, 3
      %p206 = pnand %p204, %p205
      %p207 = pneg %p206
      // Predicated region
      $region29: #{encoder_layer.3} parent=5 // pred_check
        _
      $region30: #{encoder_layer.3} parent=5 // pred_check_branch
        %209 = sbr.rel (%p206) target = $region32
      $region31: #{encoder_layer.3} parent=5 // pred_region
        %s210 = ssub.s32 %s15, 1
        %s211 = sand.u32 %s28, 1
        %s212 = scalar_lea.sflag [#allocation3], %s211
        %s213 = sand.u32 %s28, 1
        %s214 = smul.addr %s213, 8
        %s215 = scalar_lea.vmem [#allocation2], %s214
        // Predicated region
        $region33: #{encoder_layer.3} parent=31 // pred_check
          %p216 = pneg %p41
        $region34: #{encoder_layer.3} parent=31 // pred_check_branch
          %218 = sbr.rel (%p216) target = $region36
        $region35: #{encoder_layer.3} parent=31 // pred_region
          %219 = dma.done %s212, 128
        $region36: #{encoder_layer.3} parent=31 // pred_fallthru
          _
        %s220 = sand.u32 %s28, 1
        %s221 = scalar_lea.sflag [#allocation3], %s220
        %s222 = sand.u32 %s28, 1
        %s223 = smul.addr %s222, 8
        %s224 = scalar_lea.vmem [#allocation2], %s223
        %p225 = pneg %p41
        %p226 = pneg %p38
        %p227 = pneg %p62
        %p228 = pneg %p59
        %p229 = pneg %p83
        %p230 = pneg %p80
        %p231 = pneg %p109
        %p232 = pneg %p106
        %p233 = scmp.lt.s32.totalorder %s20, 1
        %s234 = scalar_select %p233, %s20, 1
        %s235 = smul.addr %s234, 8
        %s236 = scalar_lea.vmem %s3, %s235
        %p237 = pneg %p135
        %p238 = pneg %p132
        %p239 = scmp.lt.s32.totalorder %s20, 1
        %s240 = scalar_select %p239, %s20, 1
        %s241 = smul.addr %s240, 8
        %s242 = scalar_lea.vmem %s4, %s241
        %p243 = pneg %p161
        %p244 = pneg %p158
        %p245 = scmp.lt.s32.totalorder %s20, 1
        %s246 = scalar_select %p245, %s20, 1
        %s247 = smul.addr %s246, 8
        %s248 = scalar_lea.vmem %s5, %s247
        %p249 = scmp.lt.s32.totalorder %s20, 1
        %s250 = scalar_select %p249, %s20, 1
        %s251 = smul.addr %s250, 8
        %s252 = scalar_lea.vmem %s3, %s251
        %p253 = scmp.lt.s32.totalorder %s20, 1
        %s254 = scalar_select %p253, %s20, 1
        %s255 = smul.addr %s254, 8
        %s256 = scalar_lea.vmem %s4, %s255
        %p257 = scmp.lt.s32.totalorder %s20, 1
        %s258 = scalar_select %p257, %s20, 1
        %s259 = smul.addr %s258, 8
        %s260 = scalar_lea.vmem %s5, %s259
        %v261 = vld [vmem:[%s215] sm:$0xff]
        %v262 = vld [vmem:[%s1] sm:$0xff]
        %v263 = vld [vmem:[%s1 + $0x8] sm:$0xff]
        %v264 = vld [vmem:[%s1 + $0x10] sm:$0xff]
        %v265 = vld [vmem:[%s1 + $0x18] sm:$0xff]
        %v266 = vld [vmem:[%s2] sm:$0x1]
        %v268 = vlaneseq
        %v269 = vshrl.u32 %v268, 7
        %v270 = vsub.s32 0, %v269
        %v271 = vrot.slane %v266, %v270
        %vm273 = vcmask 261120
        %v275 = vsel %vm273, %v261, 0
        %277 = vmatprep.subr.mxu0 0.0
        %278 = vmatpush1.msra.mxu0 %v262
        %279 = vmatprep.subr.mxu0 0.0
        %280 = vmatpush1.msra.mxu0 %v263
        %281 = vmatprep.subr.mxu0 0.0
        %282 = vmatpush1.msra.mxu0 %v264
        %283 = vmatprep.subr.mxu0 0.0
        %284 = vmatpush1.msra.mxu0 %v265
        %285 = vmatprep.subr.mxu0 0.0
        %286 = vmatpush1.msra.mxu0 0.0
        %287 = vmatprep.subr.mxu0 0.0
        %288 = vmatpush1.msra.mxu0 0.0
        %289 = vmatprep.subr.mxu0 0.0
        %290 = vmatpush1.msra.mxu0 0.0
        %291 = vmatprep.subr.mxu0 0.0
        %292 = vmatpush1.msra.mxu0 0.0
        %293 = vmatprep.subr.mxu0 0.0
        %294 = vmatpush1.msra.mxu0 0.0
        %295 = vmatprep.subr.mxu0 0.0
        %296 = vmatpush1.msra.mxu0 0.0
        %297 = vmatprep.subr.mxu0 0.0
        %298 = vmatpush1.msra.mxu0 0.0
        %299 = vmatprep.subr.mxu0 0.0
        %300 = vmatpush1.msra.mxu0 0.0
        %301 = vmatprep.subr.mxu0 0.0
        %302 = vmatpush1.msra.mxu0 0.0
        %303 = vmatprep.subr.mxu0 0.0
        %304 = vmatpush1.msra.mxu0 0.0
        %305 = vmatprep.subr.mxu0 0.0
        %306 = vmatpush1.msra.mxu0 0.0
        %307 = vmatprep.subr.mxu0 0.0
        %308 = vmatpush1.msra.mxu0 0.0
        %309 = vmatprep.subr.mxu0 0.0
        %310 = vmatpush1.msra.mxu0 0.0
        %311 = vmatprep.subr.mxu0 0.0
        %312 = vmatpush1.msra.mxu0 0.0
        %313 = vmatprep.subr.mxu0 0.0
        %314 = vmatpush1.msra.mxu0 0.0
        %315 = vmatprep.subr.mxu0 0.0
        %316 = vmatpush1.msra.mxu0 0.0
        %317 = vmatprep.subr.mxu0 0.0
        %318 = vmatpush1.msra.mxu0 0.0
        %319 = vmatprep.subr.mxu0 0.0
        %320 = vmatpush1.msra.mxu0 0.0
        %321 = vmatprep.subr.mxu0 0.0
        %322 = vmatpush1.msra.mxu0 0.0
        %323 = vmatprep.subr.mxu0 0.0
        %324 = vmatpush1.msra.mxu0 0.0
        %325 = vmatprep.subr.mxu0 0.0
        %326 = vmatpush1.msra.mxu0 0.0
        %327 = vmatprep.subr.mxu0 0.0
        %328 = vmatpush1.msra.mxu0 0.0
        %329 = vmatprep.subr.mxu0 0.0
        %330 = vmatpush1.msra.mxu0 0.0
        %331 = vmatprep.subr.mxu0 0.0
        %332 = vmatpush1.msra.mxu0 0.0
        %333 = vmatprep.subr.mxu0 0.0
        %334 = vmatpush1.msra.mxu0 0.0
        %335 = vmatprep.subr.mxu0 0.0
        %336 = vmatpush1.msra.mxu0 0.0
        %337 = vmatprep.subr.mxu0 0.0
        %338 = vmatpush1.msra.mxu0 0.0
        %339 = vmatprep.subr.mxu0 0.0
        %340 = vmatpush1.msra.mxu0 0.0
        %341 = vmatprep.mubr.f32.mxu0 0.0
        %342 = vmatmul.mubr.f32.gmra.mrb[0].mxu0 %v275
        %v343 = vpop.f32.mrb[0].mxu0
        %v344 = vadd.f32 %v271, %v343
        %v345 = vpop.f32.mrb[0].mxu0
        %346 = vdwg.mxu0
        %347 = vst.msk [vmem:[%s252] sm:$0xff] %vm273, %v344
        %349 = vrot.lane.b32.xlu0 %v344, 96
        %v350 = vpop.permute.xlu0 %349
        %352 = vst.msk [vmem:[%s256] sm:$0xff] %vm273, %v350
        %353 = vrot.lane.b32.xlu0 %v344, 64
        %v354 = vpop.permute.xlu0 %353
        %356 = vst.msk [vmem:[%s260] sm:$0xff] %vm273, %v354
        %p357 = scmp.lt.s32.totalorder %s20, 1
        %s358 = scalar_select %p357, %s20, 1
        %s359 = smul.addr %s358, 8
        %s360 = scalar_lea.vmem %s3, %s359
        %p361 = scmp.lt.s32.totalorder %s20, 1
        %s362 = scalar_select %p361, %s20, 1
        %s363 = smul.addr %s362, 8
        %s364 = scalar_lea.vmem %s4, %s363
        %p365 = scmp.lt.s32.totalorder %s20, 1
        %s366 = scalar_select %p365, %s20, 1
        %s367 = smul.addr %s366, 8
        %s368 = scalar_lea.vmem %s5, %s367
        // Predicated region
        $region37: #{encoder_layer.3} parent=31 // pred_check
          %p369 = pneg %p106
        $region38: #{encoder_layer.3} parent=31 // pred_check_branch
          %371 = sbr.rel (%p369) target = $region40
        $region39: #{encoder_layer.3} parent=31 // pred_region
          _
        $region40: #{encoder_layer.3} parent=31 // pred_fallthru
          _
        // Predicated region
        $region41: #{encoder_layer.3} parent=31 // pred_check
          %p372 = pneg %p132
        $region42: #{encoder_layer.3} parent=31 // pred_check_branch
          %374 = sbr.rel (%p372) target = $region44
        $region43: #{encoder_layer.3} parent=31 // pred_region
          _
        $region44: #{encoder_layer.3} parent=31 // pred_fallthru
          _
        // Predicated region
        $region45: #{encoder_layer.3} parent=31 // pred_check
          %p375 = pneg %p158
        $region46: #{encoder_layer.3} parent=31 // pred_check_branch
          %377 = sbr.rel (%p375) target = $region48
        $region47: #{encoder_layer.3} parent=31 // pred_region
          _
        $region48: #{encoder_layer.3} parent=31 // pred_fallthru
          _
      $region32: #{encoder_layer.3} parent=5 // pred_fallthru
        _
      %p378 = scmp.le.s32.totalorder 2, %s15
      // Predicated region
      $region49: #{encoder_layer.3} parent=5 // pred_check
        %p379 = pneg %p378
      $region50: #{encoder_layer.3} parent=5 // pred_check_branch
        %381 = sbr.rel (%p379) target = $region52
      $region51: #{encoder_layer.3} parent=5 // pred_region
        %s382 = ssub.s32 %s15, 2
        // Predicated region
        $region53: #{encoder_layer.3} parent=51 // pred_check
          %p383 = pneg %p112
        $region54: #{encoder_layer.3} parent=51 // pred_check_branch
          %385 = sbr.rel (%p383) target = $region56
        $region55: #{encoder_layer.3} parent=51 // pred_region
          %p386 = scmp.lt.s32.totalorder %s21, 1
          %s387 = scalar_select %p386, %s21, 1
          %s388 = smul.addr %s387, 8
          %s389 = scalar_lea.vmem %s3, %s388
        $region56: #{encoder_layer.3} parent=51 // pred_fallthru
          _
        // Predicated region
        $region57: #{encoder_layer.3} parent=51 // pred_check
          %p390 = pneg %p138
        $region58: #{encoder_layer.3} parent=51 // pred_check_branch
          %392 = sbr.rel (%p390) target = $region60
        $region59: #{encoder_layer.3} parent=51 // pred_region
          %p393 = scmp.lt.s32.totalorder %s21, 1
          %s394 = scalar_select %p393, %s21, 1
          %s395 = smul.addr %s394, 8
          %s396 = scalar_lea.vmem %s4, %s395
        $region60: #{encoder_layer.3} parent=51 // pred_fallthru
          _
        // Predicated region
        $region61: #{encoder_layer.3} parent=51 // pred_check
          %p397 = pneg %p164
        $region62: #{encoder_layer.3} parent=51 // pred_check_branch
          %399 = sbr.rel (%p397) target = $region64
        $region63: #{encoder_layer.3} parent=51 // pred_region
          %p400 = scmp.lt.s32.totalorder %s21, 1
          %s401 = scalar_select %p400, %s21, 1
          %s402 = smul.addr %s401, 8
          %s403 = scalar_lea.vmem %s5, %s402
        $region64: #{encoder_layer.3} parent=51 // pred_fallthru
          _
      $region52: #{encoder_layer.3} parent=5 // pred_fallthru
        _
    $region6: #{encoder_layer.3} parent=1 // loop_footer
      %s19 = sadd.s32 1, %s15
    $region7: #{encoder_layer.3} parent=1 // loop_footer_branch
      %14 = sbr.rel target = $region3
    $region8: #{encoder_layer.3} parent=1 // loop_exit
      _
    %404 = vsyncpa [#allocation3], 1
    %s405 = scalar_lea.sflag [#allocation3], 1
    %406 = vsyncpa %s405, 1

// kernel: encoder_layer.5
$region0: #{encoder_layer.5}
  #allocation0 [shape = 'u32[]', space=smem, size = 0x4, offset = 0x4, fixed_abs, tag = 'smem constant byte address 0x4 - core index']
  #allocation1 [shape = 'u32[144,128]{1,0:T(1,128)}', space=vmem, size = 0x12000, scoped, tag = 'internal scratch']
  %s0 = inlined_call_operand.vmem [shape: f32[16,32], index: 0, kind: input, shape index: {}]
  %s1 = inlined_call_operand.vmem [shape: f32[16,32], index: 1, kind: input, shape index: {}]
  %s2 = inlined_call_operand.vmem [shape: f32[32,32], index: 2, kind: input, shape index: {}]
  %s3 = inlined_call_operand.vmem [shape: f32[1,32], index: 3, kind: input, shape index: {}]
  %s4 = inlined_call_operand.vmem [shape: f32[1,32], index: 4, kind: input, shape index: {}]
  %s5 = inlined_call_operand.vmem [shape: f32[1,32], index: 5, kind: input, shape index: {}]
  %s6 = inlined_call_operand.vmem [shape: f32[32,64], index: 6, kind: input, shape index: {}]
  %s7 = inlined_call_operand.vmem [shape: f32[1,64], index: 7, kind: input, shape index: {}]
  %s8 = inlined_call_operand.vmem [shape: f32[64,32], index: 8, kind: input, shape index: {}]
  %s9 = inlined_call_operand.vmem [shape: f32[1,32], index: 9, kind: input, shape index: {}]
  %s10 = inlined_call_operand.vmem [shape: f32[1,32], index: 10, kind: input, shape index: {}]
  %s11 = inlined_call_operand.vmem [shape: f32[1,32], index: 11, kind: input, shape index: {}]
  %s12 = inlined_call_operand.hbm [shape: f32[16,32], index: 12, kind: output, shape index: {}]
  %s13 = sld [smem:[#allocation0]]
  $region81: #{encoder_layer.5} parent=0
    _
  %s15 = ssub.s32 1, %s13
  %s16 = scalar_select 0, %s15, %s13
  $region1: #{encoder_layer.5} parent=0
    #allocation2 [shape = 'u8[8192]{0}', space=vmem, size = 0x2000, scoped, tag = 'output window, operand 0']
    #allocation3 [shape = 's32[2]{0}', space=sflag, size = 0x8, scoped, tag = 'scoped memory for encoder_layer.5']
    %17 = vsyncpa [#allocation3], 0
    %s18 = scalar_lea.sflag [#allocation3], 1
    %19 = vsyncpa %s18, 0
    loop: start=0, step=1, limit=4
    $region2: #{encoder_layer.5} parent=1 // loop_pre_header
      _
    $region3: #{encoder_layer.5} parent=1 // loop_header
      %s21 = sphi 0, %s25
      %p22 = scmp.ge.s32.totalorder %s21, 4
      %s31 = sphi 0, %s33
      %s34 = sphi 0, %s31
      %s35 = sphi 0, %s34
      %s51 = sphi 0, %s35
      %s57 = sphi 0, %s59
      %s60 = sphi 0, %s57
      %s61 = sphi 0, %s60
      %s77 = sphi 0, %s61
      %s81 = sphi 0, %s81
      %s83 = sphi 0, %s81
      %s84 = sphi 0, %s83
      %s98 = sphi 0, %s84
      %s102 = sphi 0, %s102
      %s104 = sphi 0, %s102
      %s105 = sphi 0, %s104
      %s119 = sphi 0, %s105
      %s123 = sphi 0, %s123
      %s125 = sphi 0, %s123
      %s126 = sphi 0, %s125
      %s140 = sphi 0, %s126
      %s144 = sphi 0, %s144
      %s146 = sphi 0, %s144
      %s147 = sphi 0, %s146
      %s161 = sphi 0, %s147
      %s165 = sphi 0, %s165
      %s167 = sphi 0, %s165
      %s168 = sphi 0, %s167
      %s182 = sphi 0, %s168
      %s186 = sphi 0, %s186
      %s188 = sphi 0, %s186
      %s189 = sphi 0, %s188
      %s203 = sphi 0, %s189
      %s207 = sphi 0, %s207
      %s209 = sphi 0, %s207
      %s210 = sphi 0, %s209
      %s224 = sphi 0, %s210
      %s228 = sphi 0, %s228
      %s230 = sphi 0, %s228
      %s231 = sphi 0, %s230
      %s245 = sphi 0, %s231
      %s249 = sphi 0, %s249
      %s251 = sphi 0, %s249
      %s252 = sphi 0, %s251
      %s266 = sphi 0, %s252
      %s270 = sphi 0, %s270
      %s272 = sphi 0, %s270
      %s273 = sphi 0, %s272
      %s287 = sphi 0, %s273
      %s293 = sphi 0, %s295
      %s296 = sphi 0, %s293
      %s297 = sphi 0, %s296
      %s313 = sphi 0, %s297
    $region4: #{encoder_layer.5} parent=1 // loop_header_branch
      %24 = sbr.rel (%p22) target = $region8
    $region5: #{encoder_layer.5} parent=1 // loop_body
      %s26 = ssub.s32 %s21, 1
      %s27 = ssub.s32 %s21, 2
      %s28 = sadd.s32 %s21, 1
      %s29 = ssub.s32 %s21, %s28
      %p30 = scmp.eq.s32.totalorder %s29, 0
      %s32 = sadd.s32 %s31, 1
      %s33 = scalar_select %p30, %s31, %s32
      %p36 = pneg %p30
      %p37 = scmp.eq.s32.totalorder %s21, 1
      %p38 = por %p36, %p37
      %p39 = scmp.ne.s32.totalorder %s31, %s34
      %p40 = scmp.eq.s32.totalorder %s21, 0
      %p41 = por %p39, %p40
      %p42 = scmp.ne.s32.totalorder %s31, %s34
      %p43 = scmp.eq.s32.totalorder %s26, 1
      %p44 = por %p42, %p43
      %p45 = scmp.ne.s32.totalorder %s34, %s35
      %p46 = scmp.eq.s32.totalorder %s26, 0
      %p47 = por %p45, %p46
      %p48 = scmp.ne.s32.totalorder %s34, %s35
      %p49 = scmp.eq.s32.totalorder %s27, 1
      %p50 = por %p48, %p49
      %p52 = scmp.ne.s32.totalorder %s35, %s51
      %p53 = scmp.eq.s32.totalorder %s27, 0
      %p54 = por %p52, %p53
      %s55 = ssub.s32 %s21, %s28
      %p56 = scmp.eq.s32.totalorder %s55, 0
      %s58 = sadd.s32 %s57, 1
      %s59 = scalar_select %p56, %s57, %s58
      %p62 = pneg %p56
      %p63 = scmp.eq.s32.totalorder %s21, 1
      %p64 = por %p62, %p63
      %p65 = scmp.ne.s32.totalorder %s57, %s60
      %p66 = scmp.eq.s32.totalorder %s21, 0
      %p67 = por %p65, %p66
      %p68 = scmp.ne.s32.totalorder %s57, %s60
      %p69 = scmp.eq.s32.totalorder %s26, 1
      %p70 = por %p68, %p69
      %p71 = scmp.ne.s32.totalorder %s60, %s61
      %p72 = scmp.eq.s32.totalorder %s26, 0
      %p73 = por %p71, %p72
      %p74 = scmp.ne.s32.totalorder %s60, %s61
      %p75 = scmp.eq.s32.totalorder %s27, 1
      %p76 = por %p74, %p75
      %p78 = scmp.ne.s32.totalorder %s61, %s77
      %p79 = scmp.eq.s32.totalorder %s27, 0
      %p80 = por %p78, %p79
      %s82 = sadd.s32 %s81, 1
      %p85 = scmp.eq.s32.totalorder %s21, 1
      %p86 = scmp.ne.s32.totalorder %s81, %s83
      %p87 = scmp.eq.s32.totalorder %s21, 0
      %p88 = por %p86, %p87
      %p89 = scmp.ne.s32.totalorder %s81, %s83
      %p90 = scmp.eq.s32.totalorder %s26, 1
      %p91 = por %p89, %p90
      %p92 = scmp.ne.s32.totalorder %s83, %s84
      %p93 = scmp.eq.s32.totalorder %s26, 0
      %p94 = por %p92, %p93
      %p95 = scmp.ne.s32.totalorder %s83, %s84
      %p96 = scmp.eq.s32.totalorder %s27, 1
      %p97 = por %p95, %p96
      %p99 = scmp.ne.s32.totalorder %s84, %s98
      %p100 = scmp.eq.s32.totalorder %s27, 0
      %p101 = por %p99, %p100
      %s103 = sadd.s32 %s102, 1
      %p106 = scmp.eq.s32.totalorder %s21, 1
      %p107 = scmp.ne.s32.totalorder %s102, %s104
      %p108 = scmp.eq.s32.totalorder %s21, 0
      %p109 = por %p107, %p108
      %p110 = scmp.ne.s32.totalorder %s102, %s104
      %p111 = scmp.eq.s32.totalorder %s26, 1
      %p112 = por %p110, %p111
      %p113 = scmp.ne.s32.totalorder %s104, %s105
      %p114 = scmp.eq.s32.totalorder %s26, 0
      %p115 = por %p113, %p114
      %p116 = scmp.ne.s32.totalorder %s104, %s105
      %p117 = scmp.eq.s32.totalorder %s27, 1
      %p118 = por %p116, %p117
      %p120 = scmp.ne.s32.totalorder %s105, %s119
      %p121 = scmp.eq.s32.totalorder %s27, 0
      %p122 = por %p120, %p121
      %s124 = sadd.s32 %s123, 1
      %p127 = scmp.eq.s32.totalorder %s21, 1
      %p128 = scmp.ne.s32.totalorder %s123, %s125
      %p129 = scmp.eq.s32.totalorder %s21, 0
      %p130 = por %p128, %p129
      %p131 = scmp.ne.s32.totalorder %s123, %s125
      %p132 = scmp.eq.s32.totalorder %s26, 1
      %p133 = por %p131, %p132
      %p134 = scmp.ne.s32.totalorder %s125, %s126
      %p135 = scmp.eq.s32.totalorder %s26, 0
      %p136 = por %p134, %p135
      %p137 = scmp.ne.s32.totalorder %s125, %s126
      %p138 = scmp.eq.s32.totalorder %s27, 1
      %p139 = por %p137, %p138
      %p141 = scmp.ne.s32.totalorder %s126, %s140
      %p142 = scmp.eq.s32.totalorder %s27, 0
      %p143 = por %p141, %p142
      %s145 = sadd.s32 %s144, 1
      %p148 = scmp.eq.s32.totalorder %s21, 1
      %p149 = scmp.ne.s32.totalorder %s144, %s146
      %p150 = scmp.eq.s32.totalorder %s21, 0
      %p151 = por %p149, %p150
      %p152 = scmp.ne.s32.totalorder %s144, %s146
      %p153 = scmp.eq.s32.totalorder %s26, 1
      %p154 = por %p152, %p153
      %p155 = scmp.ne.s32.totalorder %s146, %s147
      %p156 = scmp.eq.s32.totalorder %s26, 0
      %p157 = por %p155, %p156
      %p158 = scmp.ne.s32.totalorder %s146, %s147
      %p159 = scmp.eq.s32.totalorder %s27, 1
      %p160 = por %p158, %p159
      %p162 = scmp.ne.s32.totalorder %s147, %s161
      %p163 = scmp.eq.s32.totalorder %s27, 0
      %p164 = por %p162, %p163
      %s166 = sadd.s32 %s165, 1
      %p169 = scmp.eq.s32.totalorder %s21, 1
      %p170 = scmp.ne.s32.totalorder %s165, %s167
      %p171 = scmp.eq.s32.totalorder %s21, 0
      %p172 = por %p170, %p171
      %p173 = scmp.ne.s32.totalorder %s165, %s167
      %p174 = scmp.eq.s32.totalorder %s26, 1
      %p175 = por %p173, %p174
      %p176 = scmp.ne.s32.totalorder %s167, %s168
      %p177 = scmp.eq.s32.totalorder %s26, 0
      %p178 = por %p176, %p177
      %p179 = scmp.ne.s32.totalorder %s167, %s168
      %p180 = scmp.eq.s32.totalorder %s27, 1
      %p181 = por %p179, %p180
      %p183 = scmp.ne.s32.totalorder %s168, %s182
      %p184 = scmp.eq.s32.totalorder %s27, 0
      %p185 = por %p183, %p184
      %s187 = sadd.s32 %s186, 1
      %p190 = scmp.eq.s32.totalorder %s21, 1
      %p191 = scmp.ne.s32.totalorder %s186, %s188
      %p192 = scmp.eq.s32.totalorder %s21, 0
      %p193 = por %p191, %p192
      %p194 = scmp.ne.s32.totalorder %s186, %s188
      %p195 = scmp.eq.s32.totalorder %s26, 1
      %p196 = por %p194, %p195
      %p197 = scmp.ne.s32.totalorder %s188, %s189
      %p198 = scmp.eq.s32.totalorder %s26, 0
      %p199 = por %p197, %p198
      %p200 = scmp.ne.s32.totalorder %s188, %s189
      %p201 = scmp.eq.s32.totalorder %s27, 1
      %p202 = por %p200, %p201
      %p204 = scmp.ne.s32.totalorder %s189, %s203
      %p205 = scmp.eq.s32.totalorder %s27, 0
      %p206 = por %p204, %p205
      %s208 = sadd.s32 %s207, 1
      %p211 = scmp.eq.s32.totalorder %s21, 1
      %p212 = scmp.ne.s32.totalorder %s207, %s209
      %p213 = scmp.eq.s32.totalorder %s21, 0
      %p214 = por %p212, %p213
      %p215 = scmp.ne.s32.totalorder %s207, %s209
      %p216 = scmp.eq.s32.totalorder %s26, 1
      %p217 = por %p215, %p216
      %p218 = scmp.ne.s32.totalorder %s209, %s210
      %p219 = scmp.eq.s32.totalorder %s26, 0
      %p220 = por %p218, %p219
      %p221 = scmp.ne.s32.totalorder %s209, %s210
      %p222 = scmp.eq.s32.totalorder %s27, 1
      %p223 = por %p221, %p222
      %p225 = scmp.ne.s32.totalorder %s210, %s224
      %p226 = scmp.eq.s32.totalorder %s27, 0
      %p227 = por %p225, %p226
      %s229 = sadd.s32 %s228, 1
      %p232 = scmp.eq.s32.totalorder %s21, 1
      %p233 = scmp.ne.s32.totalorder %s228, %s230
      %p234 = scmp.eq.s32.totalorder %s21, 0
      %p235 = por %p233, %p234
      %p236 = scmp.ne.s32.totalorder %s228, %s230
      %p237 = scmp.eq.s32.totalorder %s26, 1
      %p238 = por %p236, %p237
      %p239 = scmp.ne.s32.totalorder %s230, %s231
      %p240 = scmp.eq.s32.totalorder %s26, 0
      %p241 = por %p239, %p240
      %p242 = scmp.ne.s32.totalorder %s230, %s231
      %p243 = scmp.eq.s32.totalorder %s27, 1
      %p244 = por %p242, %p243
      %p246 = scmp.ne.s32.totalorder %s231, %s245
      %p247 = scmp.eq.s32.totalorder %s27, 0
      %p248 = por %p246, %p247
      %s250 = sadd.s32 %s249, 1
      %p253 = scmp.eq.s32.totalorder %s21, 1
      %p254 = scmp.ne.s32.totalorder %s249, %s251
      %p255 = scmp.eq.s32.totalorder %s21, 0
      %p256 = por %p254, %p255
      %p257 = scmp.ne.s32.totalorder %s249, %s251
      %p258 = scmp.eq.s32.totalorder %s26, 1
      %p259 = por %p257, %p258
      %p260 = scmp.ne.s32.totalorder %s251, %s252
      %p261 = scmp.eq.s32.totalorder %s26, 0
      %p262 = por %p260, %p261
      %p263 = scmp.ne.s32.totalorder %s251, %s252
      %p264 = scmp.eq.s32.totalorder %s27, 1
      %p265 = por %p263, %p264
      %p267 = scmp.ne.s32.totalorder %s252, %s266
      %p268 = scmp.eq.s32.totalorder %s27, 0
      %p269 = por %p267, %p268
      %s271 = sadd.s32 %s270, 1
      %p274 = scmp.eq.s32.totalorder %s21, 1
      %p275 = scmp.ne.s32.totalorder %s270, %s272
      %p276 = scmp.eq.s32.totalorder %s21, 0
      %p277 = por %p275, %p276
      %p278 = scmp.ne.s32.totalorder %s270, %s272
      %p279 = scmp.eq.s32.totalorder %s26, 1
      %p280 = por %p278, %p279
      %p281 = scmp.ne.s32.totalorder %s272, %s273
      %p282 = scmp.eq.s32.totalorder %s26, 0
      %p283 = por %p281, %p282
      %p284 = scmp.ne.s32.totalorder %s272, %s273
      %p285 = scmp.eq.s32.totalorder %s27, 1
      %p286 = por %p284, %p285
      %p288 = scmp.ne.s32.totalorder %s273, %s287
      %p289 = scmp.eq.s32.totalorder %s27, 0
      %p290 = por %p288, %p289
      %s291 = ssub.s32 %s21, %s28
      %p292 = scmp.eq.s32.totalorder %s291, 0
      %s294 = sadd.s32 %s293, 1
      %s295 = scalar_select %p292, %s293, %s294
      %p298 = pneg %p292
      %p299 = scmp.eq.s32.totalorder %s21, 1
      %p300 = por %p298, %p299
      %p301 = scmp.ne.s32.totalorder %s293, %s296
      %p302 = scmp.eq.s32.totalorder %s21, 0
      %p303 = por %p301, %p302
      %p304 = scmp.ne.s32.totalorder %s293, %s296
      %p305 = scmp.eq.s32.totalorder %s26, 1
      %p306 = por %p304, %p305
      %p307 = scmp.ne.s32.totalorder %s296, %s297
      %p308 = scmp.eq.s32.totalorder %s26, 0
      %p309 = por %p307, %p308
      %p310 = scmp.ne.s32.totalorder %s296, %s297
      %p311 = scmp.eq.s32.totalorder %s27, 1
      %p312 = por %p310, %p311
      %p314 = scmp.ne.s32.totalorder %s297, %s313
      %p315 = scmp.eq.s32.totalorder %s27, 0
      %p316 = por %p314, %p315
      %p317 = scmp.le.s32.totalorder 1, %s21
      %p318 = scmp.lt.s32.totalorder %s21, 3
      %p319 = pnand %p317, %p318
      %p320 = pneg %p319
      // Predicated region
      $region9: #{encoder_layer.5} parent=5 // pred_check
        _
      $region10: #{encoder_layer.5} parent=5 // pred_check_branch
        %322 = sbr.rel (%p319) target = $region12
      $region11: #{encoder_layer.5} parent=5 // pred_region
        %s323 = ssub.s32 %s21, 1
        // Predicated region
        $region13: #{encoder_layer.5} parent=11 // pred_check
          %p324 = pneg %p94
        $region14: #{encoder_layer.5} parent=11 // pred_check_branch
          %326 = sbr.rel (%p324) target = $region16
        $region15: #{encoder_layer.5} parent=11 // pred_region
          _
        $region16: #{encoder_layer.5} parent=11 // pred_fallthru
          _
        // Predicated region
        $region17: #{encoder_layer.5} parent=11 // pred_check
          %p327 = pneg %p115
        $region18: #{encoder_layer.5} parent=11 // pred_check_branch
          %329 = sbr.rel (%p327) target = $region20
        $region19: #{encoder_layer.5} parent=11 // pred_region
          _
        $region20: #{encoder_layer.5} parent=11 // pred_fallthru
          _
        // Predicated region
        $region21: #{encoder_layer.5} parent=11 // pred_check
          %p330 = pneg %p136
        $region22: #{encoder_layer.5} parent=11 // pred_check_branch
          %332 = sbr.rel (%p330) target = $region24
        $region23: #{encoder_layer.5} parent=11 // pred_region
          _
        $region24: #{encoder_layer.5} parent=11 // pred_fallthru
          _
        // Predicated region
        $region25: #{encoder_layer.5} parent=11 // pred_check
          %p333 = pneg %p157
        $region26: #{encoder_layer.5} parent=11 // pred_check_branch
          %335 = sbr.rel (%p333) target = $region28
        $region27: #{encoder_layer.5} parent=11 // pred_region
          _
        $region28: #{encoder_layer.5} parent=11 // pred_fallthru
          _
        // Predicated region
        $region29: #{encoder_layer.5} parent=11 // pred_check
          %p336 = pneg %p178
        $region30: #{encoder_layer.5} parent=11 // pred_check_branch
          %338 = sbr.rel (%p336) target = $region32
        $region31: #{encoder_layer.5} parent=11 // pred_region
          _
        $region32: #{encoder_layer.5} parent=11 // pred_fallthru
          _
        // Predicated region
        $region33: #{encoder_layer.5} parent=11 // pred_check
          %p339 = pneg %p199
        $region34: #{encoder_layer.5} parent=11 // pred_check_branch
          %341 = sbr.rel (%p339) target = $region36
        $region35: #{encoder_layer.5} parent=11 // pred_region
          _
        $region36: #{encoder_layer.5} parent=11 // pred_fallthru
          _
        // Predicated region
        $region37: #{encoder_layer.5} parent=11 // pred_check
          %p342 = pneg %p220
        $region38: #{encoder_layer.5} parent=11 // pred_check_branch
          %344 = sbr.rel (%p342) target = $region40
        $region39: #{encoder_layer.5} parent=11 // pred_region
          _
        $region40: #{encoder_layer.5} parent=11 // pred_fallthru
          _
        // Predicated region
        $region41: #{encoder_layer.5} parent=11 // pred_check
          %p345 = pneg %p241
        $region42: #{encoder_layer.5} parent=11 // pred_check_branch
          %347 = sbr.rel (%p345) target = $region44
        $region43: #{encoder_layer.5} parent=11 // pred_region
          _
        $region44: #{encoder_layer.5} parent=11 // pred_fallthru
          _
        // Predicated region
        $region45: #{encoder_layer.5} parent=11 // pred_check
          %p348 = pneg %p262
        $region46: #{encoder_layer.5} parent=11 // pred_check_branch
          %350 = sbr.rel (%p348) target = $region48
        $region47: #{encoder_layer.5} parent=11 // pred_region
          _
        $region48: #{encoder_layer.5} parent=11 // pred_fallthru
          _
        // Predicated region
        $region49: #{encoder_layer.5} parent=11 // pred_check
          %p351 = pneg %p283
        $region50: #{encoder_layer.5} parent=11 // pred_check_branch
          %353 = sbr.rel (%p351) target = $region52
        $region51: #{encoder_layer.5} parent=11 // pred_region
          _
        $region52: #{encoder_layer.5} parent=11 // pred_fallthru
          _
      $region12: #{encoder_layer.5} parent=5 // pred_fallthru
        _
      %p354 = scmp.lt.s32.totalorder %s21, 2
      // Predicated region
      $region53: #{encoder_layer.5} parent=5 // pred_check
        %p355 = pneg %p354
      $region54: #{encoder_layer.5} parent=5 // pred_check_branch
        %357 = sbr.rel (%p355) target = $region56
      $region55: #{encoder_layer.5} parent=5 // pred_region
        // Predicated region
        $region57: #{encoder_layer.5} parent=55 // pred_check
          %p358 = pneg %p41
        $region58: #{encoder_layer.5} parent=55 // pred_check_branch
          %360 = sbr.rel (%p358) target = $region60
        $region59: #{encoder_layer.5} parent=55 // pred_region
          %p361 = scmp.lt.s32.totalorder %s21, 1
          %s362 = scalar_select %p361, %s21, 1
          %s363 = smul.addr %s362, 8
          %s364 = scalar_lea.vmem %s0, %s363
        $region60: #{encoder_layer.5} parent=55 // pred_fallthru
          _
        // Predicated region
        $region61: #{encoder_layer.5} parent=55 // pred_check
          %p365 = pneg %p67
        $region62: #{encoder_layer.5} parent=55 // pred_check_branch
          %367 = sbr.rel (%p365) target = $region64
        $region63: #{encoder_layer.5} parent=55 // pred_region
          %p368 = scmp.lt.s32.totalorder %s21, 1
          %s369 = scalar_select %p368, %s21, 1
          %s370 = smul.addr %s369, 8
          %s371 = scalar_lea.vmem %s1, %s370
        $region64: #{encoder_layer.5} parent=55 // pred_fallthru
          _
      $region56: #{encoder_layer.5} parent=5 // pred_fallthru
        _
      %p372 = scmp.le.s32.totalorder 1, %s21
      %p373 = scmp.lt.s32.totalorder %s21, 3
      %p374 = pnand %p372, %p373
      %p375 = pneg %p374
      // Predicated region
      $region65: #{encoder_layer.5} parent=5 // pred_check
        _
      $region66: #{encoder_layer.5} parent=5 // pred_check_branch
        %377 = sbr.rel (%p374) target = $region68
      $region67: #{encoder_layer.5} parent=5 // pred_region
        %s378 = ssub.s32 %s21, 1
        %p379 = scmp.lt.s32.totalorder %s26, 1
        %s380 = scalar_select %p379, %s26, 1
        %s381 = smul.addr %s380, 8
        %s382 = scalar_lea.vmem %s0, %s381
        %p383 = pneg %p47
        %p384 = pneg %p44
        %p385 = scmp.lt.s32.totalorder %s26, 1
        %s386 = scalar_select %p385, %s26, 1
        %s387 = smul.addr %s386, 8
        %s388 = scalar_lea.vmem %s1, %s387
        %p389 = pneg %p73
        %p390 = pneg %p70
        %p391 = pneg %p94
        %p392 = pneg %p91
        %p393 = pneg %p115
        %p394 = pneg %p112
        %p395 = pneg %p136
        %p396 = pneg %p133
        %p397 = pneg %p157
        %p398 = pneg %p154
        %p399 = pneg %p178
        %p400 = pneg %p175
        %p401 = pneg %p199
        %p402 = pneg %p196
        %p403 = pneg %p220
        %p404 = pneg %p217
        %p405 = pneg %p241
        %p406 = pneg %p238
        %p407 = pneg %p262
        %p408 = pneg %p259
        %p409 = pneg %p283
        %p410 = pneg %p280
        %p411 = pneg %p309
        %p412 = pneg %p306
        %s413 = sand.u32 %s296, 1
        %s414 = scalar_lea.sflag [#allocation3], %s413
        %s415 = sand.u32 %s296, 1
        %s416 = smul.addr %s415, 8
        %s417 = scalar_lea.vmem [#allocation2], %s416
        %p418 = scmp.lt.s32.totalorder %s26, 1
        %s419 = scalar_select %p418, %s26, 1
        %s420 = smul.addr %s419, 8
        %s421 = scalar_lea.vmem %s0, %s420
        %p422 = scmp.lt.s32.totalorder %s26, 1
        %s423 = scalar_select %p422, %s26, 1
        %s424 = smul.addr %s423, 8
        %s425 = scalar_lea.vmem %s1, %s424
        %v426 = vld [vmem:[%s421] sm:$0xff]
        %v427 = vld [vmem:[%s2] sm:$0xff]
        %v428 = vld [vmem:[%s2 + $0x8] sm:$0xff]
        %v429 = vld [vmem:[%s2 + $0x10] sm:$0xff]
        %v430 = vld [vmem:[%s2 + $0x18] sm:$0xff]
        %v431 = vld [vmem:[%s3] sm:$0x1]
        %v433 = vlaneseq
        %v434 = vshrl.u32 %v433, 7
        %v435 = vsub.s32 0, %v434
        %v436 = vrot.slane %v431, %v435
        %vm438 = vcmask 261120
        %v440 = vsel %vm438, %v426, 0
        %442 = vmatprep.subr.mxu0 0.0
        %443 = vmatpush1.msra.mxu0 %v427
        %444 = vmatprep.subr.mxu0 0.0
        %445 = vmatpush1.msra.mxu0 %v428
        %446 = vmatprep.subr.mxu0 0.0
        %447 = vmatpush1.msra.mxu0 %v429
        %448 = vmatprep.subr.mxu0 0.0
        %449 = vmatpush1.msra.mxu0 %v430
        %450 = vmatprep.subr.mxu0 0.0
        %451 = vmatpush1.msra.mxu0 0.0
        %452 = vmatprep.subr.mxu0 0.0
        %453 = vmatpush1.msra.mxu0 0.0
        %454 = vmatprep.subr.mxu0 0.0
        %455 = vmatpush1.msra.mxu0 0.0
        %456 = vmatprep.subr.mxu0 0.0
        %457 = vmatpush1.msra.mxu0 0.0
        %458 = vmatprep.subr.mxu0 0.0
        %459 = vmatpush1.msra.mxu0 0.0
        %460 = vmatprep.subr.mxu0 0.0
        %461 = vmatpush1.msra.mxu0 0.0
        %462 = vmatprep.subr.mxu0 0.0
        %463 = vmatpush1.msra.mxu0 0.0
        %464 = vmatprep.subr.mxu0 0.0
        %465 = vmatpush1.msra.mxu0 0.0
        %466 = vmatprep.subr.mxu0 0.0
        %467 = vmatpush1.msra.mxu0 0.0
        %468 = vmatprep.subr.mxu0 0.0
        %469 = vmatpush1.msra.mxu0 0.0
        %470 = vmatprep.subr.mxu0 0.0
        %471 = vmatpush1.msra.mxu0 0.0
        %472 = vmatprep.subr.mxu0 0.0
        %473 = vmatpush1.msra.mxu0 0.0
        %474 = vmatprep.subr.mxu0 0.0
        %475 = vmatpush1.msra.mxu0 0.0
        %476 = vmatprep.subr.mxu0 0.0
        %477 = vmatpush1.msra.mxu0 0.0
        %478 = vmatprep.subr.mxu0 0.0
        %479 = vmatpush1.msra.mxu0 0.0
        %480 = vmatprep.subr.mxu0 0.0
        %481 = vmatpush1.msra.mxu0 0.0
        %482 = vmatprep.subr.mxu0 0.0
        %483 = vmatpush1.msra.mxu0 0.0
        %484 = vmatprep.subr.mxu0 0.0
        %485 = vmatpush1.msra.mxu0 0.0
        %486 = vmatprep.subr.mxu0 0.0
        %487 = vmatpush1.msra.mxu0 0.0
        %488 = vmatprep.subr.mxu0 0.0
        %489 = vmatpush1.msra.mxu0 0.0
        %490 = vmatprep.subr.mxu0 0.0
        %491 = vmatpush1.msra.mxu0 0.0
        %492 = vmatprep.subr.mxu0 0.0
        %493 = vmatpush1.msra.mxu0 0.0
        %494 = vmatprep.subr.mxu0 0.0
        %495 = vmatpush1.msra.mxu0 0.0
        %496 = vmatprep.subr.mxu0 0.0
        %497 = vmatpush1.msra.mxu0 0.0
        %498 = vmatprep.subr.mxu0 0.0
        %499 = vmatpush1.msra.mxu0 0.0
        %500 = vmatprep.subr.mxu0 0.0
        %501 = vmatpush1.msra.mxu0 0.0
        %502 = vmatprep.subr.mxu0 0.0
        %503 = vmatpush1.msra.mxu0 0.0
        %504 = vmatprep.subr.mxu0 0.0
        %505 = vmatpush1.msra.mxu0 0.0
        %506 = vmatprep.mubr.f32.mxu0 0.0
        %507 = vmatmul.mubr.f32.gmra.mrb[0].mxu0 %v440
        %v508 = vpop.f32.mrb[0].mxu0
        %v509 = vadd.f32 %v436, %v508
        %v510 = vpop.f32.mrb[0].mxu0
        %511 = vdwg.mxu0
        %v512 = vld [vmem:[%s425] sm:$0xff]
        %v513 = vadd.f32 %v512, %v509
        %v514 = vld [vmem:[%s4] sm:$0x1]
        %v515 = vld [vmem:[%s5] sm:$0x1]
        %v516 = vsel %vm438, %v513, 0.0
        %517 = vadd.xlane.f32.xlu0 %v516
        %v518 = vpop.xlane.xlu0 %517
        %v519 = vrcp.pop 32.0
        %v520 = vmul.f32 %v518, %v519
        %v521 = vsub.f32 %v513, %v520
        %v522 = vmul.f32 %v521, %v521
        %v523 = vsel %vm438, %v522, 0.0
        %524 = vadd.xlane.f32.xlu0 %v523
        %v525 = vpop.xlane.xlu0 %524
        %v526 = vmul.f32 %v525, %v519
        %v527 = vadd.f32 %v526, 1e-05
        %v528 = vrsqrt.pop %v527
        %v529 = vmul.f32 %v521, %v528
        %v531 = vlaneseq
        %v532 = vshrl.u32 %v531, 7
        %v533 = vsub.s32 0, %v532
        %v534 = vrot.slane %v514, %v533
        %v536 = vmul.f32 %v529, %v534
        %v538 = vlaneseq
        %v539 = vshrl.u32 %v538, 7
        %v540 = vsub.s32 0, %v539
        %v541 = vrot.slane %v515, %v540
        %v543 = vadd.f32 %v536, %v541
        %v544 = vld [vmem:[%s6] sm:$0xff]
        %v545 = vld [vmem:[%s6 + $0x8] sm:$0xff]
        %v546 = vld [vmem:[%s6 + $0x10] sm:$0xff]
        %v547 = vld [vmem:[%s6 + $0x18] sm:$0xff]
        %v548 = vld [vmem:[%s7] sm:$0x1]
        %v550 = vlaneseq
        %v551 = vshrl.u32 %v550, 7
        %v552 = vsub.s32 0, %v551
        %v553 = vrot.slane %v548, %v552
        %v556 = vsel %vm438, %v543, 0
        %558 = vmatprep.subr.mxu0 0.0
        %559 = vmatpush1.msra.mxu0 %v544
        %560 = vmatprep.subr.mxu0 0.0
        %561 = vmatpush1.msra.mxu0 %v545
        %562 = vmatprep.subr.mxu0 0.0
        %563 = vmatpush1.msra.mxu0 %v546
        %564 = vmatprep.subr.mxu0 0.0
        %565 = vmatpush1.msra.mxu0 %v547
        %566 = vmatprep.subr.mxu0 0.0
        %567 = vmatpush1.msra.mxu0 0.0
        %568 = vmatprep.subr.mxu0 0.0
        %569 = vmatpush1.msra.mxu0 0.0
        %570 = vmatprep.subr.mxu0 0.0
        %571 = vmatpush1.msra.mxu0 0.0
        %572 = vmatprep.subr.mxu0 0.0
        %573 = vmatpush1.msra.mxu0 0.0
        %574 = vmatprep.subr.mxu0 0.0
        %575 = vmatpush1.msra.mxu0 0.0
        %576 = vmatprep.subr.mxu0 0.0
        %577 = vmatpush1.msra.mxu0 0.0
        %578 = vmatprep.subr.mxu0 0.0
        %579 = vmatpush1.msra.mxu0 0.0
        %580 = vmatprep.subr.mxu0 0.0
        %581 = vmatpush1.msra.mxu0 0.0
        %582 = vmatprep.subr.mxu0 0.0
        %583 = vmatpush1.msra.mxu0 0.0
        %584 = vmatprep.subr.mxu0 0.0
        %585 = vmatpush1.msra.mxu0 0.0
        %586 = vmatprep.subr.mxu0 0.0
        %587 = vmatpush1.msra.mxu0 0.0
        %588 = vmatprep.subr.mxu0 0.0
        %589 = vmatpush1.msra.mxu0 0.0
        %590 = vmatprep.subr.mxu0 0.0
        %591 = vmatpush1.msra.mxu0 0.0
        %592 = vmatprep.subr.mxu0 0.0
        %593 = vmatpush1.msra.mxu0 0.0
        %594 = vmatprep.subr.mxu0 0.0
        %595 = vmatpush1.msra.mxu0 0.0
        %596 = vmatprep.subr.mxu0 0.0
        %597 = vmatpush1.msra.mxu0 0.0
        %598 = vmatprep.subr.mxu0 0.0
        %599 = vmatpush1.msra.mxu0 0.0
        %600 = vmatprep.subr.mxu0 0.0
        %601 = vmatpush1.msra.mxu0 0.0
        %602 = vmatprep.subr.mxu0 0.0
        %603 = vmatpush1.msra.mxu0 0.0
        %604 = vmatprep.subr.mxu0 0.0
        %605 = vmatpush1.msra.mxu0 0.0
        %606 = vmatprep.subr.mxu0 0.0
        %607 = vmatpush1.msra.mxu0 0.0
        %608 = vmatprep.subr.mxu0 0.0
        %609 = vmatpush1.msra.mxu0 0.0
        %610 = vmatprep.subr.mxu0 0.0
        %611 = vmatpush1.msra.mxu0 0.0
        %612 = vmatprep.subr.mxu0 0.0
        %613 = vmatpush1.msra.mxu0 0.0
        %614 = vmatprep.subr.mxu0 0.0
        %615 = vmatpush1.msra.mxu0 0.0
        %616 = vmatprep.subr.mxu0 0.0
        %617 = vmatpush1.msra.mxu0 0.0
        %618 = vmatprep.subr.mxu0 0.0
        %619 = vmatpush1.msra.mxu0 0.0
        %620 = vmatprep.subr.mxu0 0.0
        %621 = vmatpush1.msra.mxu0 0.0
        %622 = vmatprep.mubr.f32.mxu0 0.0
        %623 = vmatmul.mubr.f32.gmra.mrb[0].mxu0 %v556
        %v624 = vpop.f32.mrb[0].mxu0
        %v625 = vadd.f32 %v553, %v624
        %v626 = vpop.f32.mrb[0].mxu0
        %627 = vdwg.mxu0
        %v628 = vmax.f32 %v625, 0.0
        %v629 = vld [vmem:[%s8] sm:$0xff]
        %v630 = vld [vmem:[%s8 + $0x8] sm:$0xff]
        %v631 = vld [vmem:[%s8 + $0x10] sm:$0xff]
        %v632 = vld [vmem:[%s8 + $0x18] sm:$0xff]
        %v633 = vld [vmem:[%s8 + $0x20] sm:$0xff]
        %v634 = vld [vmem:[%s8 + $0x28] sm:$0xff]
        %v635 = vld [vmem:[%s8 + $0x30] sm:$0xff]
        %v636 = vld [vmem:[%s8 + $0x38] sm:$0xff]
        %v637 = vld [vmem:[%s9] sm:$0x1]
        %v639 = vlaneseq
        %v640 = vshrl.u32 %v639, 7
        %v641 = vsub.s32 0, %v640
        %v642 = vrot.slane %v637, %v641
        %vm644 = vcmask 523264
        %v646 = vsel %vm644, %v628, 0
        %648 = vmatprep.subr.mxu0 0.0
        %649 = vmatpush1.msra.mxu0 %v629
        %650 = vmatprep.subr.mxu0 0.0
        %651 = vmatpush1.msra.mxu0 %v630
        %652 = vmatprep.subr.mxu0 0.0
        %653 = vmatpush1.msra.mxu0 %v631
        %654 = vmatprep.subr.mxu0 0.0
        %655 = vmatpush1.msra.mxu0 %v632
        %656 = vmatprep.subr.mxu0 0.0
        %657 = vmatpush1.msra.mxu0 %v633
        %658 = vmatprep.subr.mxu0 0.0
        %659 = vmatpush1.msra.mxu0 %v634
        %660 = vmatprep.subr.mxu0 0.0
        %661 = vmatpush1.msra.mxu0 %v635
        %662 = vmatprep.subr.mxu0 0.0
        %663 = vmatpush1.msra.mxu0 %v636
        %664 = vmatprep.subr.mxu0 0.0
        %665 = vmatpush1.msra.mxu0 0.0
        %666 = vmatprep.subr.mxu0 0.0
        %667 = vmatpush1.msra.mxu0 0.0
        %668 = vmatprep.subr.mxu0 0.0
        %669 = vmatpush1.msra.mxu0 0.0
        %670 = vmatprep.subr.mxu0 0.0
        %671 = vmatpush1.msra.mxu0 0.0
        %672 = vmatprep.subr.mxu0 0.0
        %673 = vmatpush1.msra.mxu0 0.0
        %674 = vmatprep.subr.mxu0 0.0
        %675 = vmatpush1.msra.mxu0 0.0
        %676 = vmatprep.subr.mxu0 0.0
        %677 = vmatpush1.msra.mxu0 0.0
        %678 = vmatprep.subr.mxu0 0.0
        %679 = vmatpush1.msra.mxu0 0.0
        %680 = vmatprep.subr.mxu0 0.0
        %681 = vmatpush1.msra.mxu0 0.0
        %682 = vmatprep.subr.mxu0 0.0
        %683 = vmatpush1.msra.mxu0 0.0
        %684 = vmatprep.subr.mxu0 0.0
        %685 = vmatpush1.msra.mxu0 0.0
        %686 = vmatprep.subr.mxu0 0.0
        %687 = vmatpush1.msra.mxu0 0.0
        %688 = vmatprep.subr.mxu0 0.0
        %689 = vmatpush1.msra.mxu0 0.0
        %690 = vmatprep.subr.mxu0 0.0
        %691 = vmatpush1.msra.mxu0 0.0
        %692 = vmatprep.subr.mxu0 0.0
        %693 = vmatpush1.msra.mxu0 0.0
        %694 = vmatprep.subr.mxu0 0.0
        %695 = vmatpush1.msra.mxu0 0.0
        %696 = vmatprep.subr.mxu0 0.0
        %697 = vmatpush1.msra.mxu0 0.0
        %698 = vmatprep.subr.mxu0 0.0
        %699 = vmatpush1.msra.mxu0 0.0
        %700 = vmatprep.subr.mxu0 0.0
        %701 = vmatpush1.msra.mxu0 0.0
        %702 = vmatprep.subr.mxu0 0.0
        %703 = vmatpush1.msra.mxu0 0.0
        %704 = vmatprep.subr.mxu0 0.0
        %705 = vmatpush1.msra.mxu0 0.0
        %706 = vmatprep.subr.mxu0 0.0
        %707 = vmatpush1.msra.mxu0 0.0
        %708 = vmatprep.subr.mxu0 0.0
        %709 = vmatpush1.msra.mxu0 0.0
        %710 = vmatprep.subr.mxu0 0.0
        %711 = vmatpush1.msra.mxu0 0.0
        %712 = vmatprep.mubr.f32.mxu0 0.0
        %713 = vmatmul.mubr.f32.gmra.mrb[0].mxu0 %v646
        %v714 = vpop.f32.mrb[0].mxu0
        %v715 = vadd.f32 %v642, %v714
        %v716 = vpop.f32.mrb[0].mxu0
        %717 = vdwg.mxu0
        %v718 = vadd.f32 %v543, %v715
        %v719 = vld [vmem:[%s10] sm:$0x1]
        %v720 = vld [vmem:[%s11] sm:$0x1]
        %v721 = vsel %vm438, %v718, 0.0
        %722 = vadd.xlane.f32.xlu0 %v721
        %v723 = vpop.xlane.xlu0 %722
        %v724 = vmul.f32 %v723, %v519
        %v725 = vsub.f32 %v718, %v724
        %v726 = vmul.f32 %v725, %v725
        %v727 = vsel %vm438, %v726, 0.0
        %728 = vadd.xlane.f32.xlu0 %v727
        %v729 = vpop.xlane.xlu0 %728
        %v730 = vmul.f32 %v729, %v519
        %v731 = vadd.f32 %v730, 1e-05
        %v732 = vrsqrt.pop %v731
        %v733 = vmul.f32 %v725, %v732
        %v735 = vlaneseq
        %v736 = vshrl.u32 %v735, 7
        %v737 = vsub.s32 0, %v736
        %v738 = vrot.slane %v719, %v737
        %v740 = vmul.f32 %v733, %v738
        %v742 = vlaneseq
        %v743 = vshrl.u32 %v742, 7
        %v744 = vsub.s32 0, %v743
        %v745 = vrot.slane %v720, %v744
        %v747 = vadd.f32 %v740, %v745
        %748 = vst.msk [vmem:[%s417] sm:$0xff] %vm438, %v747
        %s749 = sand.u32 %s296, 1
        %s750 = scalar_lea.sflag [#allocation3], %s749
        %s751 = sand.u32 %s296, 1
        %s752 = smul.addr %s751, 8
        %s753 = scalar_lea.vmem [#allocation2], %s752
        // Predicated region
        $region69: #{encoder_layer.5} parent=67 // pred_check
          %p754 = pneg %p306
        $region70: #{encoder_layer.5} parent=67 // pred_check_branch
          %756 = sbr.rel (%p754) target = $region72
        $region71: #{encoder_layer.5} parent=67 // pred_region
          %s758 = ssub.s32 128, 128
          %759 = vsyncadd %s750, %s758
          %s760 = smul.addr %s26, 128
          %s761 = scalar_lea.hbm %s12, %s760
          %s763 = sshll.u32 %s753, 4
          %s764 = int_to_ptr.vmem [resolvable:$true] %s763
          %766 = dma.vmem_to_hbm [thread:$0]  %s764, 128, %s761, %s750
        $region72: #{encoder_layer.5} parent=67 // pred_fallthru
          _
      $region68: #{encoder_layer.5} parent=5 // pred_fallthru
        _
      %p767 = scmp.le.s32.totalorder 2, %s21
      // Predicated region
      $region73: #{encoder_layer.5} parent=5 // pred_check
        %p768 = pneg %p767
      $region74: #{encoder_layer.5} parent=5 // pred_check_branch
        %770 = sbr.rel (%p768) target = $region76
      $region75: #{encoder_layer.5} parent=5 // pred_region
        %s771 = ssub.s32 %s21, 2
        // Predicated region
        $region77: #{encoder_layer.5} parent=75 // pred_check
          %p772 = pneg %p312
        $region78: #{encoder_layer.5} parent=75 // pred_check_branch
          %774 = sbr.rel (%p772) target = $region80
        $region79: #{encoder_layer.5} parent=75 // pred_region
          %s775 = sand.u32 %s297, 1
          %s776 = scalar_lea.sflag [#allocation3], %s775
          %s777 = sand.u32 %s297, 1
          %s778 = smul.addr %s777, 8
          %s779 = scalar_lea.vmem [#allocation2], %s778
          %780 = dma.done %s776, 128
        $region80: #{encoder_layer.5} parent=75 // pred_fallthru
          _
      $region76: #{encoder_layer.5} parent=5 // pred_fallthru
        _
    $region6: #{encoder_layer.5} parent=1 // loop_footer
      %s25 = sadd.s32 1, %s21
    $region7: #{encoder_layer.5} parent=1 // loop_footer_branch
      %20 = sbr.rel target = $region3
    $region8: #{encoder_layer.5} parent=1 // loop_exit
      _
    %781 = vsyncpa [#allocation3], 1
    %s782 = scalar_lea.sflag [#allocation3], 1
    %783 = vsyncpa %s782, 1

// kernel: encoder_layer.4
$region0: #{encoder_layer.4}
  #allocation0 [shape = 'u32[]', space=smem, size = 0x4, offset = 0x4, fixed_abs, tag = 'smem constant byte address 0x4 - core index']
  #allocation1 [shape = 'u32[144,128]{1,0:T(1,128)}', space=vmem, size = 0x12000, scoped, tag = 'internal scratch']
  %s0 = inlined_call_operand.vmem [shape: f32[2,8,32], index: 0, kind: input, shape index: {}]
  %s1 = inlined_call_operand.vmem [shape: f32[2,8,32], index: 1, kind: input, shape index: {}]
  %s2 = inlined_call_operand.vmem [shape: f32[2,8,32], index: 2, kind: input, shape index: {}]
  %s3 = inlined_call_operand.vmem [shape: f32[2,8,32], index: 3, kind: output, shape index: {}]
  %s4 = sld [smem:[#allocation0]]
  $region45: #{encoder_layer.4} parent=0
    _
  %s6 = ssub.s32 1, %s4
  %s7 = scalar_select 0, %s6, %s4
  loop: start=0, step=1, limit=4
  $region2: #{encoder_layer.4} parent=0 // loop_pre_header
    _
  $region3: #{encoder_layer.4} parent=0 // loop_header
    %s9 = sphi 0, %s13
    %p10 = scmp.ge.s32.totalorder %s9, 4
    %s16 = sphi 0, %s28
    %s17 = sphi 0, %s24
    %s18 = sphi 0, %s16
    %s19 = sphi 0, %s17
    %s20 = sphi 0, %s18
    %s21 = sphi 0, %s19
    %s33 = sphi 0, %s35
    %s36 = sphi 0, %s33
    %s37 = sphi 0, %s36
    %s53 = sphi 0, %s37
    %s61 = sphi 0, %s63
    %s64 = sphi 0, %s61
    %s65 = sphi 0, %s64
    %s81 = sphi 0, %s65
    %s89 = sphi 0, %s91
    %s92 = sphi 0, %s89
    %s93 = sphi 0, %s92
    %s109 = sphi 0, %s93
    %s117 = sphi 0, %s119
    %s120 = sphi 0, %s117
    %s121 = sphi 0, %s120
    %s137 = sphi 0, %s121
  $region4: #{encoder_layer.4} parent=0 // loop_header_branch
    %12 = sbr.rel (%p10) target = $region8
  $region5: #{encoder_layer.4} parent=0 // loop_body
    %s14 = ssub.s32 %s9, 1
    %s15 = ssub.s32 %s9, 2
    %s22 = sadd.s32 1, %s17
    %p23 = scmp.ge.s32.totalorder %s22, 1
    %s24 = scalar_select %p23, 0, %s22
    %s25 = sadd.s32 1, %s16
    %s26 = scalar_select %p23, %s25, %s16
    %p27 = scmp.ge.s32.totalorder %s26, 2
    %s28 = scalar_select %p27, 0, %s26
    %s29 = ssub.s32 %s16, %s28
    %s30 = ssub.s32 %s17, %s24
    %s31 = sor.u32 %s29, %s30
    %p32 = scmp.eq.s32.totalorder %s31, 0
    %s34 = sadd.s32 %s33, 1
    %s35 = scalar_select %p32, %s33, %s34
    %p38 = pneg %p32
    %p39 = scmp.eq.s32.totalorder %s9, 1
    %p40 = por %p38, %p39
    %p41 = scmp.ne.s32.totalorder %s33, %s36
    %p42 = scmp.eq.s32.totalorder %s9, 0
    %p43 = por %p41, %p42
    %p44 = scmp.ne.s32.totalorder %s33, %s36
    %p45 = scmp.eq.s32.totalorder %s14, 1
    %p46 = por %p44, %p45
    %p47 = scmp.ne.s32.totalorder %s36, %s37
    %p48 = scmp.eq.s32.totalorder %s14, 0
    %p49 = por %p47, %p48
    %p50 = scmp.ne.s32.totalorder %s36, %s37
    %p51 = scmp.eq.s32.totalorder %s15, 1
    %p52 = por %p50, %p51
    %p54 = scmp.ne.s32.totalorder %s37, %s53
    %p55 = scmp.eq.s32.totalorder %s15, 0
    %p56 = por %p54, %p55
    %s57 = ssub.s32 %s16, %s28
    %s58 = ssub.s32 %s17, %s24
    %s59 = sor.u32 %s57, %s58
    %p60 = scmp.eq.s32.totalorder %s59, 0
    %s62 = sadd.s32 %s61, 1
    %s63 = scalar_select %p60, %s61, %s62
    %p66 = pneg %p60
    %p67 = scmp.eq.s32.totalorder %s9, 1
    %p68 = por %p66, %p67
    %p69 = scmp.ne.s32.totalorder %s61, %s64
    %p70 = scmp.eq.s32.totalorder %s9, 0
    %p71 = por %p69, %p70
    %p72 = scmp.ne.s32.totalorder %s61, %s64
    %p73 = scmp.eq.s32.totalorder %s14, 1
    %p74 = por %p72, %p73
    %p75 = scmp.ne.s32.totalorder %s64, %s65
    %p76 = scmp.eq.s32.totalorder %s14, 0
    %p77 = por %p75, %p76
    %p78 = scmp.ne.s32.totalorder %s64, %s65
    %p79 = scmp.eq.s32.totalorder %s15, 1
    %p80 = por %p78, %p79
    %p82 = scmp.ne.s32.totalorder %s65, %s81
    %p83 = scmp.eq.s32.totalorder %s15, 0
    %p84 = por %p82, %p83
    %s85 = ssub.s32 %s16, %s28
    %s86 = ssub.s32 %s17, %s24
    %s87 = sor.u32 %s85, %s86
    %p88 = scmp.eq.s32.totalorder %s87, 0
    %s90 = sadd.s32 %s89, 1
    %s91 = scalar_select %p88, %s89, %s90
    %p94 = pneg %p88
    %p95 = scmp.eq.s32.totalorder %s9, 1
    %p96 = por %p94, %p95
    %p97 = scmp.ne.s32.totalorder %s89, %s92
    %p98 = scmp.eq.s32.totalorder %s9, 0
    %p99 = por %p97, %p98
    %p100 = scmp.ne.s32.totalorder %s89, %s92
    %p101 = scmp.eq.s32.totalorder %s14, 1
    %p102 = por %p100, %p101
    %p103 = scmp.ne.s32.totalorder %s92, %s93
    %p104 = scmp.eq.s32.totalorder %s14, 0
    %p105 = por %p103, %p104
    %p106 = scmp.ne.s32.totalorder %s92, %s93
    %p107 = scmp.eq.s32.totalorder %s15, 1
    %p108 = por %p106, %p107
    %p110 = scmp.ne.s32.totalorder %s93, %s109
    %p111 = scmp.eq.s32.totalorder %s15, 0
    %p112 = por %p110, %p111
    %s113 = ssub.s32 %s16, %s28
    %s114 = ssub.s32 %s17, %s24
    %s115 = sor.u32 %s113, %s114
    %p116 = scmp.eq.s32.totalorder %s115, 0
    %s118 = sadd.s32 %s117, 1
    %s119 = scalar_select %p116, %s117, %s118
    %p122 = pneg %p116
    %p123 = scmp.eq.s32.totalorder %s9, 1
    %p124 = por %p122, %p123
    %p125 = scmp.ne.s32.totalorder %s117, %s120
    %p126 = scmp.eq.s32.totalorder %s9, 0
    %p127 = por %p125, %p126
    %p128 = scmp.ne.s32.totalorder %s117, %s120
    %p129 = scmp.eq.s32.totalorder %s14, 1
    %p130 = por %p128, %p129
    %p131 = scmp.ne.s32.totalorder %s120, %s121
    %p132 = scmp.eq.s32.totalorder %s14, 0
    %p133 = por %p131, %p132
    %p134 = scmp.ne.s32.totalorder %s120, %s121
    %p135 = scmp.eq.s32.totalorder %s15, 1
    %p136 = por %p134, %p135
    %p138 = scmp.ne.s32.totalorder %s121, %s137
    %p139 = scmp.eq.s32.totalorder %s15, 0
    %p140 = por %p138, %p139
    %p141 = scmp.le.s32.totalorder 1, %s9
    %p142 = scmp.lt.s32.totalorder %s9, 3
    %p143 = pnand %p141, %p142
    %p144 = pneg %p143
    // Predicated region
    $region9: #{encoder_layer.4} parent=5 // pred_check
      _
    $region10: #{encoder_layer.4} parent=5 // pred_check_branch
      %146 = sbr.rel (%p143) target = $region12
    $region11: #{encoder_layer.4} parent=5 // pred_region
      %s147 = ssub.s32 %s9, 1
    $region12: #{encoder_layer.4} parent=5 // pred_fallthru
      _
    %p148 = scmp.lt.s32.totalorder %s9, 2
    // Predicated region
    $region13: #{encoder_layer.4} parent=5 // pred_check
      %p149 = pneg %p148
    $region14: #{encoder_layer.4} parent=5 // pred_check_branch
      %151 = sbr.rel (%p149) target = $region16
    $region15: #{encoder_layer.4} parent=5 // pred_region
      // Predicated region
      $region17: #{encoder_layer.4} parent=15 // pred_check
        %p152 = pneg %p43
      $region18: #{encoder_layer.4} parent=15 // pred_check_branch
        %154 = sbr.rel (%p152) target = $region20
      $region19: #{encoder_layer.4} parent=15 // pred_region
        %p155 = scmp.lt.s32.totalorder %s16, 1
        %s156 = scalar_select %p155, %s16, 1
        %p157 = scmp.lt.s32.totalorder %s17, 0
        %s158 = scalar_select %p157, %s17, 0
        %s159 = sadd.s32 %s158, %s156
        %s160 = smul.addr %s159, 8
        %s161 = scalar_lea.vmem %s0, %s160
      $region20: #{encoder_layer.4} parent=15 // pred_fallthru
        _
      // Predicated region
      $region21: #{encoder_layer.4} parent=15 // pred_check
        %p162 = pneg %p71
      $region22: #{encoder_layer.4} parent=15 // pred_check_branch
        %164 = sbr.rel (%p162) target = $region24
      $region23: #{encoder_layer.4} parent=15 // pred_region
        %p165 = scmp.lt.s32.totalorder %s16, 1
        %s166 = scalar_select %p165, %s16, 1
        %p167 = scmp.lt.s32.totalorder %s17, 0
        %s168 = scalar_select %p167, %s17, 0
        %s169 = sadd.s32 %s168, %s166
        %s170 = smul.addr %s169, 8
        %s171 = scalar_lea.vmem %s1, %s170
      $region24: #{encoder_layer.4} parent=15 // pred_fallthru
        _
      // Predicated region
      $region25: #{encoder_layer.4} parent=15 // pred_check
        %p172 = pneg %p99
      $region26: #{encoder_layer.4} parent=15 // pred_check_branch
        %174 = sbr.rel (%p172) target = $region28
      $region27: #{encoder_layer.4} parent=15 // pred_region
        %p175 = scmp.lt.s32.totalorder %s16, 1
        %s176 = scalar_select %p175, %s16, 1
        %p177 = scmp.lt.s32.totalorder %s17, 0
        %s178 = scalar_select %p177, %s17, 0
        %s179 = sadd.s32 %s178, %s176
        %s180 = smul.addr %s179, 8
        %s181 = scalar_lea.vmem %s2, %s180
      $region28: #{encoder_layer.4} parent=15 // pred_fallthru
        _
    $region16: #{encoder_layer.4} parent=5 // pred_fallthru
      _
    %p182 = scmp.le.s32.totalorder 1, %s9
    %p183 = scmp.lt.s32.totalorder %s9, 3
    %p184 = pnand %p182, %p183
    %p185 = pneg %p184
    // Predicated region
    $region29: #{encoder_layer.4} parent=5 // pred_check
      _
    $region30: #{encoder_layer.4} parent=5 // pred_check_branch
      %187 = sbr.rel (%p184) target = $region32
    $region31: #{encoder_layer.4} parent=5 // pred_region
      %s188 = ssub.s32 %s9, 1
      %p189 = scmp.lt.s32.totalorder %s18, 1
      %s190 = scalar_select %p189, %s18, 1
      %p191 = scmp.lt.s32.totalorder %s19, 0
      %s192 = scalar_select %p191, %s19, 0
      %s193 = sadd.s32 %s192, %s190
      %s194 = smul.addr %s193, 8
      %s195 = scalar_lea.vmem %s0, %s194
      %p196 = pneg %p49
      %p197 = pneg %p46
      %p198 = scmp.lt.s32.totalorder %s18, 1
      %s199 = scalar_select %p198, %s18, 1
      %p200 = scmp.lt.s32.totalorder %s19, 0
      %s201 = scalar_select %p200, %s19, 0
      %s202 = sadd.s32 %s201, %s199
      %s203 = smul.addr %s202, 8
      %s204 = scalar_lea.vmem %s1, %s203
      %p205 = pneg %p77
      %p206 = pneg %p74
      %p207 = scmp.lt.s32.totalorder %s18, 1
      %s208 = scalar_select %p207, %s18, 1
      %p209 = scmp.lt.s32.totalorder %s19, 0
      %s210 = scalar_select %p209, %s19, 0
      %s211 = sadd.s32 %s210, %s208
      %s212 = smul.addr %s211, 8
      %s213 = scalar_lea.vmem %s2, %s212
      %p214 = pneg %p105
      %p215 = pneg %p102
      %p216 = pneg %p133
      %p217 = pneg %p130
      %p218 = scmp.lt.s32.totalorder %s18, 1
      %s219 = scalar_select %p218, %s18, 1
      %p220 = scmp.lt.s32.totalorder %s19, 0
      %s221 = scalar_select %p220, %s19, 0
      %s222 = sadd.s32 %s221, %s219
      %s223 = smul.addr %s222, 8
      %s224 = scalar_lea.vmem %s3, %s223
      %p225 = scmp.lt.s32.totalorder %s18, 1
      %s226 = scalar_select %p225, %s18, 1
      %p227 = scmp.lt.s32.totalorder %s19, 0
      %s228 = scalar_select %p227, %s19, 0
      %s229 = sadd.s32 %s228, %s226
      %s230 = smul.addr %s229, 8
      %s231 = scalar_lea.vmem %s0, %s230
      %p232 = scmp.lt.s32.totalorder %s18, 1
      %s233 = scalar_select %p232, %s18, 1
      %p234 = scmp.lt.s32.totalorder %s19, 0
      %s235 = scalar_select %p234, %s19, 0
      %s236 = sadd.s32 %s235, %s233
      %s237 = smul.addr %s236, 8
      %s238 = scalar_lea.vmem %s1, %s237
      %p239 = scmp.lt.s32.totalorder %s18, 1
      %s240 = scalar_select %p239, %s18, 1
      %p241 = scmp.lt.s32.totalorder %s19, 0
      %s242 = scalar_select %p241, %s19, 0
      %s243 = sadd.s32 %s242, %s240
      %s244 = smul.addr %s243, 8
      %s245 = scalar_lea.vmem %s2, %s244
      %p246 = scmp.lt.s32.totalorder %s18, 1
      %s247 = scalar_select %p246, %s18, 1
      %p248 = scmp.lt.s32.totalorder %s19, 0
      %s249 = scalar_select %p248, %s19, 0
      %s250 = sadd.s32 %s249, %s247
      %s251 = smul.addr %s250, 8
      %s252 = scalar_lea.vmem %s3, %s251
      %v253 = vld [vmem:[%s231] sm:$0xff]
      %v254 = vld [vmem:[%s238] sm:$0xff]
      %v255 = vld [vmem:[%s245] sm:$0xff]
      %vm256 = vcmask 64512
      %v258 = vsel %vm256, %v253, 0
      %v261 = vsel %vm256, %v254, 0
      %263 = vmatprep.subr.mxu0 0.0
      %264 = vmatpush1.xpose.msra.mxu0 %v261
      %265 = vmatprep.subr.mxu0 0.0
      %266 = vmatpush1.xpose.msra.mxu0 0.0
      %267 = vmatprep.subr.mxu0 0.0
      %268 = vmatpush1.xpose.msra.mxu0 0.0
      %269 = vmatprep.subr.mxu0 0.0
      %270 = vmatpush1.xpose.msra.mxu0 0.0
      %271 = vmatprep.subr.mxu0 0.0
      %272 = vmatpush1.xpose.msra.mxu0 0.0
      %273 = vmatprep.subr.mxu0 0.0
      %274 = vmatpush1.xpose.msra.mxu0 0.0
      %275 = vmatprep.subr.mxu0 0.0
      %276 = vmatpush1.xpose.msra.mxu0 0.0
      %277 = vmatprep.subr.mxu0 0.0
      %278 = vmatpush1.xpose.msra.mxu0 0.0
      %279 = vmatprep.subr.mxu0 0.0
      %280 = vmatpush1.xpose.msra.mxu0 0.0
      %281 = vmatprep.subr.mxu0 0.0
      %282 = vmatpush1.xpose.msra.mxu0 0.0
      %283 = vmatprep.subr.mxu0 0.0
      %284 = vmatpush1.xpose.msra.mxu0 0.0
      %285 = vmatprep.subr.mxu0 0.0
      %286 = vmatpush1.xpose.msra.mxu0 0.0
      %287 = vmatprep.subr.mxu0 0.0
      %288 = vmatpush1.xpose.msra.mxu0 0.0
      %289 = vmatprep.subr.mxu0 0.0
      %290 = vmatpush1.xpose.msra.mxu0 0.0
      %291 = vmatprep.subr.mxu0 0.0
      %292 = vmatpush1.xpose.msra.mxu0 0.0
      %293 = vmatprep.subr.mxu0 0.0
      %294 = vmatpush1.xpose.msra.mxu0 0.0
      %295 = vmatprep.subr.mxu0 0.0
      %296 = vmatpush1.xpose.msra.mxu0 0.0
      %297 = vmatprep.subr.mxu0 0.0
      %298 = vmatpush1.xpose.msra.mxu0 0.0
      %299 = vmatprep.subr.mxu0 0.0
      %300 = vmatpush1.xpose.msra.mxu0 0.0
      %301 = vmatprep.subr.mxu0 0.0
      %302 = vmatpush1.xpose.msra.mxu0 0.0
      %303 = vmatprep.subr.mxu0 0.0
      %304 = vmatpush1.xpose.msra.mxu0 0.0
      %305 = vmatprep.subr.mxu0 0.0
      %306 = vmatpush1.xpose.msra.mxu0 0.0
      %307 = vmatprep.subr.mxu0 0.0
      %308 = vmatpush1.xpose.msra.mxu0 0.0
      %309 = vmatprep.subr.mxu0 0.0
      %310 = vmatpush1.xpose.msra.mxu0 0.0
      %311 = vmatprep.subr.mxu0 0.0
      %312 = vmatpush1.xpose.msra.mxu0 0.0
      %313 = vmatprep.subr.mxu0 0.0
      %314 = vmatpush1.xpose.msra.mxu0 0.0
      %315 = vmatprep.subr.mxu0 0.0
      %316 = vmatpush1.xpose.msra.mxu0 0.0
      %317 = vmatprep.subr.mxu0 0.0
      %318 = vmatpush1.xpose.msra.mxu0 0.0
      %319 = vmatprep.subr.mxu0 0.0
      %320 = vmatpush1.xpose.msra.mxu0 0.0
      %321 = vmatprep.subr.mxu0 0.0
      %322 = vmatpush1.xpose.msra.mxu0 0.0
      %323 = vmatprep.subr.mxu0 0.0
      %324 = vmatpush1.xpose.msra.mxu0 0.0
      %325 = vmatprep.subr.mxu0 0.0
      %326 = vmatpush1.xpose.msra.mxu0 0.0
      %327 = vmatprep.mubr.f32.mxu0 0.0
      %328 = vmatmul.mubr.f32.gmra.mrb[0].mxu0 %v258
      %v329 = vpop.f32.mrb[0].mxu0
      %v330 = vadd.f32 0.0, %v329
      %v331 = vpop.f32.mrb[0].mxu0
      %332 = vdwg.mxu0
      %v333 = vsel %vm256, %v330, -inf
      %334 = vmax.xlane.f32.xlu0 %v333
      %v335 = vpop.xlane.xlu0 %334
      %v336 = vsub.f32 %v330, %v335
      %v337 = vmul.f32 %v336, 1.442695
      %v338 = vpow.pop %v337
      %v339 = vsel %vm256, %v338, 0.0
      %340 = vadd.xlane.f32.xlu0 %v339
      %v341 = vpop.xlane.xlu0 %340
      %v343 = vsel %vm256, %v338, 0
      %345 = vmatprep.subr.mxu0 0.0
      %346 = vmatpush1.msra.mxu0 %v255
      %347 = vmatprep.subr.mxu0 0.0
      %348 = vmatpush1.msra.mxu0 0.0
      %349 = vmatprep.subr.mxu0 0.0
      %350 = vmatpush1.msra.mxu0 0.0
      %351 = vmatprep.subr.mxu0 0.0
      %352 = vmatpush1.msra.mxu0 0.0
      %353 = vmatprep.subr.mxu0 0.0
      %354 = vmatpush1.msra.mxu0 0.0
      %355 = vmatprep.subr.mxu0 0.0
      %356 = vmatpush1.msra.mxu0 0.0
      %357 = vmatprep.subr.mxu0 0.0
      %358 = vmatpush1.msra.mxu0 0.0
      %359 = vmatprep.subr.mxu0 0.0
      %360 = vmatpush1.msra.mxu0 0.0
      %361 = vmatprep.subr.mxu0 0.0
      %362 = vmatpush1.msra.mxu0 0.0
      %363 = vmatprep.subr.mxu0 0.0
      %364 = vmatpush1.msra.mxu0 0.0
      %365 = vmatprep.subr.mxu0 0.0
      %366 = vmatpush1.msra.mxu0 0.0
      %367 = vmatprep.subr.mxu0 0.0
      %368 = vmatpush1.msra.mxu0 0.0
      %369 = vmatprep.subr.mxu0 0.0
      %370 = vmatpush1.msra.mxu0 0.0
      %371 = vmatprep.subr.mxu0 0.0
      %372 = vmatpush1.msra.mxu0 0.0
      %373 = vmatprep.subr.mxu0 0.0
      %374 = vmatpush1.msra.mxu0 0.0
      %375 = vmatprep.subr.mxu0 0.0
      %376 = vmatpush1.msra.mxu0 0.0
      %377 = vmatprep.subr.mxu0 0.0
      %378 = vmatpush1.msra.mxu0 0.0
      %379 = vmatprep.subr.mxu0 0.0
      %380 = vmatpush1.msra.mxu0 0.0
      %381 = vmatprep.subr.mxu0 0.0
      %382 = vmatpush1.msra.mxu0 0.0
      %383 = vmatprep.subr.mxu0 0.0
      %384 = vmatpush1.msra.mxu0 0.0
      %385 = vmatprep.subr.mxu0 0.0
      %386 = vmatpush1.msra.mxu0 0.0
      %387 = vmatprep.subr.mxu0 0.0
      %388 = vmatpush1.msra.mxu0 0.0
      %389 = vmatprep.subr.mxu0 0.0
      %390 = vmatpush1.msra.mxu0 0.0
      %391 = vmatprep.subr.mxu0 0.0
      %392 = vmatpush1.msra.mxu0 0.0
      %393 = vmatprep.subr.mxu0 0.0
      %394 = vmatpush1.msra.mxu0 0.0
      %395 = vmatprep.subr.mxu0 0.0
      %396 = vmatpush1.msra.mxu0 0.0
      %397 = vmatprep.subr.mxu0 0.0
      %398 = vmatpush1.msra.mxu0 0.0
      %399 = vmatprep.subr.mxu0 0.0
      %400 = vmatpush1.msra.mxu0 0.0
      %401 = vmatprep.subr.mxu0 0.0
      %402 = vmatpush1.msra.mxu0 0.0
      %403 = vmatprep.subr.mxu0 0.0
      %404 = vmatpush1.msra.mxu0 0.0
      %405 = vmatprep.subr.mxu0 0.0
      %406 = vmatpush1.msra.mxu0 0.0
      %407 = vmatprep.subr.mxu0 0.0
      %408 = vmatpush1.msra.mxu0 0.0
      %409 = vmatprep.mubr.f32.mxu0 0.0
      %410 = vmatmul.mubr.f32.gmra.mrb[0].mxu0 %v343
      %v411 = vpop.f32.mrb[0].mxu0
      %v412 = vadd.f32 0.0, %v411
      %v413 = vpop.f32.mrb[0].mxu0
      %414 = vdwg.mxu0
      %v415 = vrcp.pop %v341
      %v416 = vmul.f32 %v412, %v415
      %417 = vrot.lane.b32.xlu0 %v253, 120
      %v418 = vpop.permute.xlu0 %417
      %419 = vrot.lane.b32.xlu0 %v254, 120
      %v420 = vpop.permute.xlu0 %419
      %v421 = vsel %vm256, %v418, 0
      %v423 = vsel %vm256, %v420, 0
      %425 = vmatprep.subr.mxu0 0.0
      %426 = vmatpush1.xpose.msra.mxu0 %v423
      %427 = vmatprep.subr.mxu0 0.0
      %428 = vmatpush1.xpose.msra.mxu0 0.0
      %429 = vmatprep.subr.mxu0 0.0
      %430 = vmatpush1.xpose.msra.mxu0 0.0
      %431 = vmatprep.subr.mxu0 0.0
      %432 = vmatpush1.xpose.msra.mxu0 0.0
      %433 = vmatprep.subr.mxu0 0.0
      %434 = vmatpush1.xpose.msra.mxu0 0.0
      %435 = vmatprep.subr.mxu0 0.0
      %436 = vmatpush1.xpose.msra.mxu0 0.0
      %437 = vmatprep.subr.mxu0 0.0
      %438 = vmatpush1.xpose.msra.mxu0 0.0
      %439 = vmatprep.subr.mxu0 0.0
      %440 = vmatpush1.xpose.msra.mxu0 0.0
      %441 = vmatprep.subr.mxu0 0.0
      %442 = vmatpush1.xpose.msra.mxu0 0.0
      %443 = vmatprep.subr.mxu0 0.0
      %444 = vmatpush1.xpose.msra.mxu0 0.0
      %445 = vmatprep.subr.mxu0 0.0
      %446 = vmatpush1.xpose.msra.mxu0 0.0
      %447 = vmatprep.subr.mxu0 0.0
      %448 = vmatpush1.xpose.msra.mxu0 0.0
      %449 = vmatprep.subr.mxu0 0.0
      %450 = vmatpush1.xpose.msra.mxu0 0.0
      %451 = vmatprep.subr.mxu0 0.0
      %452 = vmatpush1.xpose.msra.mxu0 0.0
      %453 = vmatprep.subr.mxu0 0.0
      %454 = vmatpush1.xpose.msra.mxu0 0.0
      %455 = vmatprep.subr.mxu0 0.0
      %456 = vmatpush1.xpose.msra.mxu0 0.0
      %457 = vmatprep.subr.mxu0 0.0
      %458 = vmatpush1.xpose.msra.mxu0 0.0
      %459 = vmatprep.subr.mxu0 0.0
      %460 = vmatpush1.xpose.msra.mxu0 0.0
      %461 = vmatprep.subr.mxu0 0.0
      %462 = vmatpush1.xpose.msra.mxu0 0.0
      %463 = vmatprep.subr.mxu0 0.0
      %464 = vmatpush1.xpose.msra.mxu0 0.0
      %465 = vmatprep.subr.mxu0 0.0
      %466 = vmatpush1.xpose.msra.mxu0 0.0
      %467 = vmatprep.subr.mxu0 0.0
      %468 = vmatpush1.xpose.msra.mxu0 0.0
      %469 = vmatprep.subr.mxu0 0.0
      %470 = vmatpush1.xpose.msra.mxu0 0.0
      %471 = vmatprep.subr.mxu0 0.0
      %472 = vmatpush1.xpose.msra.mxu0 0.0
      %473 = vmatprep.subr.mxu0 0.0
      %474 = vmatpush1.xpose.msra.mxu0 0.0
      %475 = vmatprep.subr.mxu0 0.0
      %476 = vmatpush1.xpose.msra.mxu0 0.0
      %477 = vmatprep.subr.mxu0 0.0
      %478 = vmatpush1.xpose.msra.mxu0 0.0
      %479 = vmatprep.subr.mxu0 0.0
      %480 = vmatpush1.xpose.msra.mxu0 0.0
      %481 = vmatprep.subr.mxu0 0.0
      %482 = vmatpush1.xpose.msra.mxu0 0.0
      %483 = vmatprep.subr.mxu0 0.0
      %484 = vmatpush1.xpose.msra.mxu0 0.0
      %485 = vmatprep.subr.mxu0 0.0
      %486 = vmatpush1.xpose.msra.mxu0 0.0
      %487 = vmatprep.subr.mxu0 0.0
      %488 = vmatpush1.xpose.msra.mxu0 0.0
      %489 = vmatprep.mubr.f32.mxu0 0.0
      %490 = vmatmul.mubr.f32.gmra.mrb[0].mxu0 %v421
      %v491 = vpop.f32.mrb[0].mxu0
      %v492 = vadd.f32 0.0, %v491
      %v493 = vpop.f32.mrb[0].mxu0
      %494 = vdwg.mxu0
      %v495 = vsel %vm256, %v492, -inf
      %496 = vmax.xlane.f32.xlu0 %v495
      %v497 = vpop.xlane.xlu0 %496
      %v498 = vsub.f32 %v492, %v497
      %v499 = vmul.f32 %v498, 1.442695
      %v500 = vpow.pop %v499
      %v501 = vsel %vm256, %v500, 0.0
      %502 = vadd.xlane.f32.xlu0 %v501
      %v503 = vpop.xlane.xlu0 %502
      %505 = vrot.lane.b32.xlu0 %v255, 120
      %v506 = vpop.permute.xlu0 %505
      %v509 = vsel %vm256, %v500, 0
      %511 = vmatprep.subr.mxu0 0.0
      %512 = vmatpush1.msra.mxu0 %v506
      %513 = vmatprep.subr.mxu0 0.0
      %514 = vmatpush1.msra.mxu0 0.0
      %515 = vmatprep.subr.mxu0 0.0
      %516 = vmatpush1.msra.mxu0 0.0
      %517 = vmatprep.subr.mxu0 0.0
      %518 = vmatpush1.msra.mxu0 0.0
      %519 = vmatprep.subr.mxu0 0.0
      %520 = vmatpush1.msra.mxu0 0.0
      %521 = vmatprep.subr.mxu0 0.0
      %522 = vmatpush1.msra.mxu0 0.0
      %523 = vmatprep.subr.mxu0 0.0
      %524 = vmatpush1.msra.mxu0 0.0
      %525 = vmatprep.subr.mxu0 0.0
      %526 = vmatpush1.msra.mxu0 0.0
      %527 = vmatprep.subr.mxu0 0.0
      %528 = vmatpush1.msra.mxu0 0.0
      %529 = vmatprep.subr.mxu0 0.0
      %530 = vmatpush1.msra.mxu0 0.0
      %531 = vmatprep.subr.mxu0 0.0
      %532 = vmatpush1.msra.mxu0 0.0
      %533 = vmatprep.subr.mxu0 0.0
      %534 = vmatpush1.msra.mxu0 0.0
      %535 = vmatprep.subr.mxu0 0.0
      %536 = vmatpush1.msra.mxu0 0.0
      %537 = vmatprep.subr.mxu0 0.0
      %538 = vmatpush1.msra.mxu0 0.0
      %539 = vmatprep.subr.mxu0 0.0
      %540 = vmatpush1.msra.mxu0 0.0
      %541 = vmatprep.subr.mxu0 0.0
      %542 = vmatpush1.msra.mxu0 0.0
      %543 = vmatprep.subr.mxu0 0.0
      %544 = vmatpush1.msra.mxu0 0.0
      %545 = vmatprep.subr.mxu0 0.0
      %546 = vmatpush1.msra.mxu0 0.0
      %547 = vmatprep.subr.mxu0 0.0
      %548 = vmatpush1.msra.mxu0 0.0
      %549 = vmatprep.subr.mxu0 0.0
      %550 = vmatpush1.msra.mxu0 0.0
      %551 = vmatprep.subr.mxu0 0.0
      %552 = vmatpush1.msra.mxu0 0.0
      %553 = vmatprep.subr.mxu0 0.0
      %554 = vmatpush1.msra.mxu0 0.0
      %555 = vmatprep.subr.mxu0 0.0
      %556 = vmatpush1.msra.mxu0 0.0
      %557 = vmatprep.subr.mxu0 0.0
      %558 = vmatpush1.msra.mxu0 0.0
      %559 = vmatprep.subr.mxu0 0.0
      %560 = vmatpush1.msra.mxu0 0.0
      %561 = vmatprep.subr.mxu0 0.0
      %562 = vmatpush1.msra.mxu0 0.0
      %563 = vmatprep.subr.mxu0 0.0
      %564 = vmatpush1.msra.mxu0 0.0
      %565 = vmatprep.subr.mxu0 0.0
      %566 = vmatpush1.msra.mxu0 0.0
      %567 = vmatprep.subr.mxu0 0.0
      %568 = vmatpush1.msra.mxu0 0.0
      %569 = vmatprep.subr.mxu0 0.0
      %570 = vmatpush1.msra.mxu0 0.0
      %571 = vmatprep.subr.mxu0 0.0
      %572 = vmatpush1.msra.mxu0 0.0
      %573 = vmatprep.subr.mxu0 0.0
      %574 = vmatpush1.msra.mxu0 0.0
      %575 = vmatprep.mubr.f32.mxu0 0.0
      %576 = vmatmul.mubr.f32.gmra.mrb[0].mxu0 %v509
      %v577 = vpop.f32.mrb[0].mxu0
      %v578 = vadd.f32 0.0, %v577
      %v579 = vpop.f32.mrb[0].mxu0
      %580 = vdwg.mxu0
      %v581 = vrcp.pop %v503
      %v582 = vmul.f32 %v578, %v581
      %583 = vrot.lane.b32.xlu0 %v253, 112
      %v584 = vpop.permute.xlu0 %583
      %585 = vrot.lane.b32.xlu0 %v254, 112
      %v586 = vpop.permute.xlu0 %585
      %v587 = vsel %vm256, %v584, 0
      %v589 = vsel %vm256, %v586, 0
      %591 = vmatprep.subr.mxu0 0.0
      %592 = vmatpush1.xpose.msra.mxu0 %v589
      %593 = vmatprep.subr.mxu0 0.0
      %594 = vmatpush1.xpose.msra.mxu0 0.0
      %595 = vmatprep.subr.mxu0 0.0
      %596 = vmatpush1.xpose.msra.mxu0 0.0
      %597 = vmatprep.subr.mxu0 0.0
      %598 = vmatpush1.xpose.msra.mxu0 0.0
      %599 = vmatprep.subr.mxu0 0.0
      %600 = vmatpush1.xpose.msra.mxu0 0.0
      %601 = vmatprep.subr.mxu0 0.0
      %602 = vmatpush1.xpose.msra.mxu0 0.0
      %603 = vmatprep.subr.mxu0 0.0
      %604 = vmatpush1.xpose.msra.mxu0 0.0
      %605 = vmatprep.subr.mxu0 0.0
      %606 = vmatpush1.xpose.msra.mxu0 0.0
      %607 = vmatprep.subr.mxu0 0.0
      %608 = vmatpush1.xpose.msra.mxu0 0.0
      %609 = vmatprep.subr.mxu0 0.0
      %610 = vmatpush1.xpose.msra.mxu0 0.0
      %611 = vmatprep.subr.mxu0 0.0
      %612 = vmatpush1.xpose.msra.mxu0 0.0
      %613 = vmatprep.subr.mxu0 0.0
      %614 = vmatpush1.xpose.msra.mxu0 0.0
      %615 = vmatprep.subr.mxu0 0.0
      %616 = vmatpush1.xpose.msra.mxu0 0.0
      %617 = vmatprep.subr.mxu0 0.0
      %618 = vmatpush1.xpose.msra.mxu0 0.0
      %619 = vmatprep.subr.mxu0 0.0
      %620 = vmatpush1.xpose.msra.mxu0 0.0
      %621 = vmatprep.subr.mxu0 0.0
      %622 = vmatpush1.xpose.msra.mxu0 0.0
      %623 = vmatprep.subr.mxu0 0.0
      %624 = vmatpush1.xpose.msra.mxu0 0.0
      %625 = vmatprep.subr.mxu0 0.0
      %626 = vmatpush1.xpose.msra.mxu0 0.0
      %627 = vmatprep.subr.mxu0 0.0
      %628 = vmatpush1.xpose.msra.mxu0 0.0
      %629 = vmatprep.subr.mxu0 0.0
      %630 = vmatpush1.xpose.msra.mxu0 0.0
      %631 = vmatprep.subr.mxu0 0.0
      %632 = vmatpush1.xpose.msra.mxu0 0.0
      %633 = vmatprep.subr.mxu0 0.0
      %634 = vmatpush1.xpose.msra.mxu0 0.0
      %635 = vmatprep.subr.mxu0 0.0
      %636 = vmatpush1.xpose.msra.mxu0 0.0
      %637 = vmatprep.subr.mxu0 0.0
      %638 = vmatpush1.xpose.msra.mxu0 0.0
      %639 = vmatprep.subr.mxu0 0.0
      %640 = vmatpush1.xpose.msra.mxu0 0.0
      %641 = vmatprep.subr.mxu0 0.0
      %642 = vmatpush1.xpose.msra.mxu0 0.0
      %643 = vmatprep.subr.mxu0 0.0
      %644 = vmatpush1.xpose.msra.mxu0 0.0
      %645 = vmatprep.subr.mxu0 0.0
      %646 = vmatpush1.xpose.msra.mxu0 0.0
      %647 = vmatprep.subr.mxu0 0.0
      %648 = vmatpush1.xpose.msra.mxu0 0.0
      %649 = vmatprep.subr.mxu0 0.0
      %650 = vmatpush1.xpose.msra.mxu0 0.0
      %651 = vmatprep.subr.mxu0 0.0
      %652 = vmatpush1.xpose.msra.mxu0 0.0
      %653 = vmatprep.subr.mxu0 0.0
      %654 = vmatpush1.xpose.msra.mxu0 0.0
      %655 = vmatprep.mubr.f32.mxu0 0.0
      %656 = vmatmul.mubr.f32.gmra.mrb[0].mxu0 %v587
      %v657 = vpop.f32.mrb[0].mxu0
      %v658 = vadd.f32 0.0, %v657
      %v659 = vpop.f32.mrb[0].mxu0
      %660 = vdwg.mxu0
      %v661 = vsel %vm256, %v658, -inf
      %662 = vmax.xlane.f32.xlu0 %v661
      %v663 = vpop.xlane.xlu0 %662
      %v664 = vsub.f32 %v658, %v663
      %v665 = vmul.f32 %v664, 1.442695
      %v666 = vpow.pop %v665
      %v667 = vsel %vm256, %v666, 0.0
      %668 = vadd.xlane.f32.xlu0 %v667
      %v669 = vpop.xlane.xlu0 %668
      %670 = vrot.lane.b32.xlu0 %v255, 112
      %v671 = vpop.permute.xlu0 %670
      %v674 = vsel %vm256, %v666, 0
      %676 = vmatprep.subr.mxu0 0.0
      %677 = vmatpush1.msra.mxu0 %v671
      %678 = vmatprep.subr.mxu0 0.0
      %679 = vmatpush1.msra.mxu0 0.0
      %680 = vmatprep.subr.mxu0 0.0
      %681 = vmatpush1.msra.mxu0 0.0
      %682 = vmatprep.subr.mxu0 0.0
      %683 = vmatpush1.msra.mxu0 0.0
      %684 = vmatprep.subr.mxu0 0.0
      %685 = vmatpush1.msra.mxu0 0.0
      %686 = vmatprep.subr.mxu0 0.0
      %687 = vmatpush1.msra.mxu0 0.0
      %688 = vmatprep.subr.mxu0 0.0
      %689 = vmatpush1.msra.mxu0 0.0
      %690 = vmatprep.subr.mxu0 0.0
      %691 = vmatpush1.msra.mxu0 0.0
      %692 = vmatprep.subr.mxu0 0.0
      %693 = vmatpush1.msra.mxu0 0.0
      %694 = vmatprep.subr.mxu0 0.0
      %695 = vmatpush1.msra.mxu0 0.0
      %696 = vmatprep.subr.mxu0 0.0
      %697 = vmatpush1.msra.mxu0 0.0
      %698 = vmatprep.subr.mxu0 0.0
      %699 = vmatpush1.msra.mxu0 0.0
      %700 = vmatprep.subr.mxu0 0.0
      %701 = vmatpush1.msra.mxu0 0.0
      %702 = vmatprep.subr.mxu0 0.0
      %703 = vmatpush1.msra.mxu0 0.0
      %704 = vmatprep.subr.mxu0 0.0
      %705 = vmatpush1.msra.mxu0 0.0
      %706 = vmatprep.subr.mxu0 0.0
      %707 = vmatpush1.msra.mxu0 0.0
      %708 = vmatprep.subr.mxu0 0.0
      %709 = vmatpush1.msra.mxu0 0.0
      %710 = vmatprep.subr.mxu0 0.0
      %711 = vmatpush1.msra.mxu0 0.0
      %712 = vmatprep.subr.mxu0 0.0
      %713 = vmatpush1.msra.mxu0 0.0
      %714 = vmatprep.subr.mxu0 0.0
      %715 = vmatpush1.msra.mxu0 0.0
      %716 = vmatprep.subr.mxu0 0.0
      %717 = vmatpush1.msra.mxu0 0.0
      %718 = vmatprep.subr.mxu0 0.0
      %719 = vmatpush1.msra.mxu0 0.0
      %720 = vmatprep.subr.mxu0 0.0
      %721 = vmatpush1.msra.mxu0 0.0
      %722 = vmatprep.subr.mxu0 0.0
      %723 = vmatpush1.msra.mxu0 0.0
      %724 = vmatprep.subr.mxu0 0.0
      %725 = vmatpush1.msra.mxu0 0.0
      %726 = vmatprep.subr.mxu0 0.0
      %727 = vmatpush1.msra.mxu0 0.0
      %728 = vmatprep.subr.mxu0 0.0
      %729 = vmatpush1.msra.mxu0 0.0
      %730 = vmatprep.subr.mxu0 0.0
      %731 = vmatpush1.msra.mxu0 0.0
      %732 = vmatprep.subr.mxu0 0.0
      %733 = vmatpush1.msra.mxu0 0.0
      %734 = vmatprep.subr.mxu0 0.0
      %735 = vmatpush1.msra.mxu0 0.0
      %736 = vmatprep.subr.mxu0 0.0
      %737 = vmatpush1.msra.mxu0 0.0
      %738 = vmatprep.subr.mxu0 0.0
      %739 = vmatpush1.msra.mxu0 0.0
      %740 = vmatprep.mubr.f32.mxu0 0.0
      %741 = vmatmul.mubr.f32.gmra.mrb[0].mxu0 %v674
      %v742 = vpop.f32.mrb[0].mxu0
      %v743 = vadd.f32 0.0, %v742
      %v744 = vpop.f32.mrb[0].mxu0
      %745 = vdwg.mxu0
      %v746 = vrcp.pop %v669
      %v747 = vmul.f32 %v743, %v746
      %748 = vrot.lane.b32.xlu0 %v253, 104
      %v749 = vpop.permute.xlu0 %748
      %750 = vrot.lane.b32.xlu0 %v254, 104
      %v751 = vpop.permute.xlu0 %750
      %v752 = vsel %vm256, %v749, 0
      %v754 = vsel %vm256, %v751, 0
      %756 = vmatprep.subr.mxu0 0.0
      %757 = vmatpush1.xpose.msra.mxu0 %v754
      %758 = vmatprep.subr.mxu0 0.0
      %759 = vmatpush1.xpose.msra.mxu0 0.0
      %760 = vmatprep.subr.mxu0 0.0
      %761 = vmatpush1.xpose.msra.mxu0 0.0
      %762 = vmatprep.subr.mxu0 0.0
      %763 = vmatpush1.xpose.msra.mxu0 0.0
      %764 = vmatprep.subr.mxu0 0.0
      %765 = vmatpush1.xpose.msra.mxu0 0.0
      %766 = vmatprep.subr.mxu0 0.0
      %767 = vmatpush1.xpose.msra.mxu0 0.0
      %768 = vmatprep.subr.mxu0 0.0
      %769 = vmatpush1.xpose.msra.mxu0 0.0
      %770 = vmatprep.subr.mxu0 0.0
      %771 = vmatpush1.xpose.msra.mxu0 0.0
      %772 = vmatprep.subr.mxu0 0.0
      %773 = vmatpush1.xpose.msra.mxu0 0.0
      %774 = vmatprep.subr.mxu0 0.0
      %775 = vmatpush1.xpose.msra.mxu0 0.0
      %776 = vmatprep.subr.mxu0 0.0
      %777 = vmatpush1.xpose.msra.mxu0 0.0
      %778 = vmatprep.subr.mxu0 0.0
      %779 = vmatpush1.xpose.msra.mxu0 0.0
      %780 = vmatprep.subr.mxu0 0.0
      %781 = vmatpush1.xpose.msra.mxu0 0.0
      %782 = vmatprep.subr.mxu0 0.0
      %783 = vmatpush1.xpose.msra.mxu0 0.0
      %784 = vmatprep.subr.mxu0 0.0
      %785 = vmatpush1.xpose.msra.mxu0 0.0
      %786 = vmatprep.subr.mxu0 0.0
      %787 = vmatpush1.xpose.msra.mxu0 0.0
      %788 = vmatprep.subr.mxu0 0.0
      %789 = vmatpush1.xpose.msra.mxu0 0.0
      %790 = vmatprep.subr.mxu0 0.0
      %791 = vmatpush1.xpose.msra.mxu0 0.0
      %792 = vmatprep.subr.mxu0 0.0
      %793 = vmatpush1.xpose.msra.mxu0 0.0
      %794 = vmatprep.subr.mxu0 0.0
      %795 = vmatpush1.xpose.msra.mxu0 0.0
      %796 = vmatprep.subr.mxu0 0.0
      %797 = vmatpush1.xpose.msra.mxu0 0.0
      %798 = vmatprep.subr.mxu0 0.0
      %799 = vmatpush1.xpose.msra.mxu0 0.0
      %800 = vmatprep.subr.mxu0 0.0
      %801 = vmatpush1.xpose.msra.mxu0 0.0
      %802 = vmatprep.subr.mxu0 0.0
      %803 = vmatpush1.xpose.msra.mxu0 0.0
      %804 = vmatprep.subr.mxu0 0.0
      %805 = vmatpush1.xpose.msra.mxu0 0.0
      %806 = vmatprep.subr.mxu0 0.0
      %807 = vmatpush1.xpose.msra.mxu0 0.0
      %808 = vmatprep.subr.mxu0 0.0
      %809 = vmatpush1.xpose.msra.mxu0 0.0
      %810 = vmatprep.subr.mxu0 0.0
      %811 = vmatpush1.xpose.msra.mxu0 0.0
      %812 = vmatprep.subr.mxu0 0.0
      %813 = vmatpush1.xpose.msra.mxu0 0.0
      %814 = vmatprep.subr.mxu0 0.0
      %815 = vmatpush1.xpose.msra.mxu0 0.0
      %816 = vmatprep.subr.mxu0 0.0
      %817 = vmatpush1.xpose.msra.mxu0 0.0
      %818 = vmatprep.subr.mxu0 0.0
      %819 = vmatpush1.xpose.msra.mxu0 0.0
      %820 = vmatprep.mubr.f32.mxu0 0.0
      %821 = vmatmul.mubr.f32.gmra.mrb[0].mxu0 %v752
      %v822 = vpop.f32.mrb[0].mxu0
      %v823 = vadd.f32 0.0, %v822
      %v824 = vpop.f32.mrb[0].mxu0
      %825 = vdwg.mxu0
      %v826 = vsel %vm256, %v823, -inf
      %827 = vmax.xlane.f32.xlu0 %v826
      %v828 = vpop.xlane.xlu0 %827
      %v829 = vsub.f32 %v823, %v828
      %v830 = vmul.f32 %v829, 1.442695
      %v831 = vpow.pop %v830
      %v832 = vsel %vm256, %v831, 0.0
      %833 = vadd.xlane.f32.xlu0 %v832
      %v834 = vpop.xlane.xlu0 %833
      %835 = vrot.lane.b32.xlu0 %v255, 104
      %v836 = vpop.permute.xlu0 %835
      %v839 = vsel %vm256, %v831, 0
      %841 = vmatprep.subr.mxu0 0.0
      %842 = vmatpush1.msra.mxu0 %v836
      %843 = vmatprep.subr.mxu0 0.0
      %844 = vmatpush1.msra.mxu0 0.0
      %845 = vmatprep.subr.mxu0 0.0
      %846 = vmatpush1.msra.mxu0 0.0
      %847 = vmatprep.subr.mxu0 0.0
      %848 = vmatpush1.msra.mxu0 0.0
      %849 = vmatprep.subr.mxu0 0.0
      %850 = vmatpush1.msra.mxu0 0.0
      %851 = vmatprep.subr.mxu0 0.0
      %852 = vmatpush1.msra.mxu0 0.0
      %853 = vmatprep.subr.mxu0 0.0
      %854 = vmatpush1.msra.mxu0 0.0
      %855 = vmatprep.subr.mxu0 0.0
      %856 = vmatpush1.msra.mxu0 0.0
      %857 = vmatprep.subr.mxu0 0.0
      %858 = vmatpush1.msra.mxu0 0.0
      %859 = vmatprep.subr.mxu0 0.0
      %860 = vmatpush1.msra.mxu0 0.0
      %861 = vmatprep.subr.mxu0 0.0
      %862 = vmatpush1.msra.mxu0 0.0
      %863 = vmatprep.subr.mxu0 0.0
      %864 = vmatpush1.msra.mxu0 0.0
      %865 = vmatprep.subr.mxu0 0.0
      %866 = vmatpush1.msra.mxu0 0.0
      %867 = vmatprep.subr.mxu0 0.0
      %868 = vmatpush1.msra.mxu0 0.0
      %869 = vmatprep.subr.mxu0 0.0
      %870 = vmatpush1.msra.mxu0 0.0
      %871 = vmatprep.subr.mxu0 0.0
      %872 = vmatpush1.msra.mxu0 0.0
      %873 = vmatprep.subr.mxu0 0.0
      %874 = vmatpush1.msra.mxu0 0.0
      %875 = vmatprep.subr.mxu0 0.0
      %876 = vmatpush1.msra.mxu0 0.0
      %877 = vmatprep.subr.mxu0 0.0
      %878 = vmatpush1.msra.mxu0 0.0
      %879 = vmatprep.subr.mxu0 0.0
      %880 = vmatpush1.msra.mxu0 0.0
      %881 = vmatprep.subr.mxu0 0.0
      %882 = vmatpush1.msra.mxu0 0.0
      %883 = vmatprep.subr.mxu0 0.0
      %884 = vmatpush1.msra.mxu0 0.0
      %885 = vmatprep.subr.mxu0 0.0
      %886 = vmatpush1.msra.mxu0 0.0
      %887 = vmatprep.subr.mxu0 0.0
      %888 = vmatpush1.msra.mxu0 0.0
      %889 = vmatprep.subr.mxu0 0.0
      %890 = vmatpush1.msra.mxu0 0.0
      %891 = vmatprep.subr.mxu0 0.0
      %892 = vmatpush1.msra.mxu0 0.0
      %893 = vmatprep.subr.mxu0 0.0
      %894 = vmatpush1.msra.mxu0 0.0
      %895 = vmatprep.subr.mxu0 0.0
      %896 = vmatpush1.msra.mxu0 0.0
      %897 = vmatprep.subr.mxu0 0.0
      %898 = vmatpush1.msra.mxu0 0.0
      %899 = vmatprep.subr.mxu0 0.0
      %900 = vmatpush1.msra.mxu0 0.0
      %901 = vmatprep.subr.mxu0 0.0
      %902 = vmatpush1.msra.mxu0 0.0
      %903 = vmatprep.subr.mxu0 0.0
      %904 = vmatpush1.msra.mxu0 0.0
      %905 = vmatprep.mubr.f32.mxu0 0.0
      %906 = vmatmul.mubr.f32.gmra.mrb[0].mxu0 %v839
      %v907 = vpop.f32.mrb[0].mxu0
      %v908 = vadd.f32 0.0, %v907
      %v909 = vpop.f32.mrb[0].mxu0
      %910 = vdwg.mxu0
      %v911 = vrcp.pop %v834
      %v912 = vmul.f32 %v908, %v911
      %914 = vrot.lane.b32.xlu0 %v582, 8
      %v915 = vpop.permute.xlu0 %914
      %918 = vrot.lane.b32.xlu0 %v747, 16
      %v919 = vpop.permute.xlu0 %918
      %922 = vrot.lane.b32.xlu0 %v912, 24
      %v923 = vpop.permute.xlu0 %922
      %v925 = vsel %vm256, %v416, %v915
      %vm926 = vcmask 130048
      %v927 = vsel %vm926, %v925, %v919
      %vm928 = vcmask 195584
      %v929 = vsel %vm928, %v927, %v923
      %vm930 = vcmask 261120
      %931 = vst.msk [vmem:[%s252] sm:$0xff] %vm930, %v929
      %p932 = scmp.lt.s32.totalorder %s18, 1
      %s933 = scalar_select %p932, %s18, 1
      %p934 = scmp.lt.s32.totalorder %s19, 0
      %s935 = scalar_select %p934, %s19, 0
      %s936 = sadd.s32 %s935, %s933
      %s937 = smul.addr %s936, 8
      %s938 = scalar_lea.vmem %s3, %s937
      // Predicated region
      $region33: #{encoder_layer.4} parent=31 // pred_check
        %p939 = pneg %p130
      $region34: #{encoder_layer.4} parent=31 // pred_check_branch
        %941 = sbr.rel (%p939) target = $region36
      $region35: #{encoder_layer.4} parent=31 // pred_region
        _
      $region36: #{encoder_layer.4} parent=31 // pred_fallthru
        _
    $region32: #{encoder_layer.4} parent=5 // pred_fallthru
      _
    %p942 = scmp.le.s32.totalorder 2, %s9
    // Predicated region
    $region37: #{encoder_layer.4} parent=5 // pred_check
      %p943 = pneg %p942
    $region38: #{encoder_layer.4} parent=5 // pred_check_branch
      %945 = sbr.rel (%p943) target = $region40
    $region39: #{encoder_layer.4} parent=5 // pred_region
      %s946 = ssub.s32 %s9, 2
      // Predicated region
      $region41: #{encoder_layer.4} parent=39 // pred_check
        %p947 = pneg %p136
      $region42: #{encoder_layer.4} parent=39 // pred_check_branch
        %949 = sbr.rel (%p947) target = $region44
      $region43: #{encoder_layer.4} parent=39 // pred_region
        %p950 = scmp.lt.s32.totalorder %s20, 1
        %s951 = scalar_select %p950, %s20, 1
        %p952 = scmp.lt.s32.totalorder %s21, 0
        %s953 = scalar_select %p952, %s21, 0
        %s954 = sadd.s32 %s953, %s951
        %s955 = smul.addr %s954, 8
        %s956 = scalar_lea.vmem %s3, %s955
      $region44: #{encoder_layer.4} parent=39 // pred_fallthru
        _
    $region40: #{encoder_layer.4} parent=5 // pred_fallthru
      _
  $region6: #{encoder_layer.4} parent=0 // loop_footer
    %s13 = sadd.s32 1, %s9
  $region7: #{encoder_layer.4} parent=0 // loop_footer_branch
    %8 = sbr.rel target = $region3
  $region8: #{encoder_layer.4} parent=0 // loop_exit
    _

</llo_original>
